<compile_context>
chip_gen: v7x
topology: tpu7x:2x2x1
jax: 0.10.0
libtpu: 0.0.40
codegen_flags: <defaults>
</compile_context>

<pallas_src>
import functools

import jax
import jax.numpy as jnp
from jax.experimental import pallas as pl
from jax.experimental.pallas import tpu as pltpu


# ---------------------------------------------------------------------------
# Kernel 1: the true recurrence.
#   pre[t] = cnn@W_cnn + emb_t@W_emb + b   is precomputed outside the kernel.
#   per step:  h_t = tanh(pre[t] + h_{t-1} @ W_h)
# ---------------------------------------------------------------------------
def rnn_recurrence_kernel(pre_ref, h0_ref, w_h_ref,
                          h_all_ref, h_final_ref,
                          h_scratch, *, t_blk):
    tb = pl.program_id(0)

    @pl.when(tb == 0)
    def _():
        h_scratch[...] = h0_ref[...]

    w_h = w_h_ref[...]                                   # [H, H], loaded once per block

    # Static unroll over the time block: tiny per-step matmul + EUP tanh; unrolling gives
    # the scheduler visibility to overlap step i's tanh with step i+1's MXU push.
    for i in range(t_blk):
        h_old = h_scratch[...]                           # [B, H]
        pre = pre_ref[i] + jnp.dot(h_old, w_h, preferred_element_type=jnp.float32)
        h_new = jnp.tanh(pre)
        h_scratch[...] = h_new
        h_all_ref[:, i, :] = h_new                       # batch-major [B, T_BLK, H] block

    # Only the last grid step needs to emit the final hidden state.
    @pl.when(tb == pl.num_programs(0) - 1)
    def _():
        h_final_ref[...] = h_scratch[...]


# ---------------------------------------------------------------------------
# Kernel 2: batched output projection (no sequential dependence -> parallel grid).
#   logits[rows, V] = h[rows, H] @ W_out.T + b_out,  rows = B*T (batch-major).
# ---------------------------------------------------------------------------
def output_projection_kernel(h_ref, w_ref, b_ref, out_ref):
    out_ref[...] = (jnp.dot(h_ref[...], w_ref[...],
                            preferred_element_type=jnp.float32)
                    + b_ref[...])


def rnn_one_layer_forward(tokens, processed_cnn_features, initial_hidden_state,
                          cell_weight, cell_bias, out_weight, out_bias, emb_table):
    """Training-mode forward pass of RNNOneLayerSimplified.

    tokens:                  [B, T] int32
    processed_cnn_features:  [B, C] float32
    initial_hidden_state:    [1, B, H] float32
    cell_weight:             [C + E + H, H] float32   (torch.cat([cnn, emb, h]) order)
    cell_bias:               [1, H] float32
    out_weight:              [V, H] float32  (nn.Linear weight)
    out_bias:                [V]    float32
    emb_table:               [V, E] float32

    Returns (logits [B, T, V], hidden_state [1, B, H]).
    """
    B, T = tokens.shape
    C = processed_cnn_features.shape[1]
    H = initial_hidden_state.shape[2]
    V, E = emb_table.shape

    # ---- plain-JAX glue: weight split, time-major gather, hoisted projections ----
    w_cnn = cell_weight[:C]                              # [C, H]
    w_emb = cell_weight[C:C + E]                         # [E, H]
    w_h = cell_weight[C + E:]                            # [H, H]

    emb_tm = emb_table[tokens.T]                         # [T, B, E], gathered time-major

    # Time-invariant CNN term (computed ONCE) + batched embedding projection.
    cnn_contrib = processed_cnn_features @ w_cnn + cell_bias             # [B, H]
    pre_in = jnp.einsum('tbe,eh->tbh', emb_tm, w_emb) + cnn_contrib[None]  # [T, B, H]
    pre_in = pre_in.astype(jnp.float32)

    h0 = initial_hidden_state[0]                         # [B, H]

    # ---- Pallas kernel 1: sequential recurrence, T_BLK timesteps per grid step ----
    t_blk = 8 if T % 8 == 0 else 1
    grid_r = (T // t_blk,)

    h_all, h_final = pl.pallas_call(
        functools.partial(rnn_recurrence_kernel, t_blk=t_blk),
        grid_spec=pltpu.PrefetchScalarGridSpec(
            num_scalar_prefetch=0,
            grid=grid_r,
            in_specs=[
                pl.BlockSpec((t_blk, B, H), lambda tb: (tb, 0, 0)),   # pre[t] slab
                pl.BlockSpec((B, H), lambda tb: (0, 0)),              # h0
                pl.BlockSpec((H, H), lambda tb: (0, 0)),              # W_h
            ],
            out_specs=[
                pl.BlockSpec((B, t_blk, H), lambda tb: (0, tb, 0)),   # h_all, batch-major
                pl.BlockSpec((B, H), lambda tb: (0, 0)),              # final hidden state
            ],
            scratch_shapes=[pltpu.VMEM((B, H), jnp.float32)],         # recurrent carry
        ),
        out_shape=(
            jax.ShapeDtypeStruct((B, T, H), jnp.float32),
            jax.ShapeDtypeStruct((B, H), jnp.float32),
        ),
        compiler_params=pltpu.CompilerParams(
            dimension_semantics=("arbitrary",),          # recurrence: must stay sequential
            vmem_limit_bytes=64 * 1024 * 1024,
        ),
        cost_estimate=pl.CostEstimate(
            flops=2 * T * B * H * H,
            transcendentals=T * B * H,
            bytes_accessed=4 * (2 * T * B * H + H * H + 2 * B * H),
        ),
    )(pre_in, h0, w_h)

    # ---- Pallas kernel 2: tiled, parallel output projection over all T*B rows ----
    rows = B * T
    h_flat = h_all.reshape(rows, H)          # free view: batch-major rows, no transpose

    r_blk = min(rows, 256)
    if rows % r_blk != 0:
        r_blk = rows
    v_blk = 128 if V % 128 == 0 else V       # tile V so the [H,V] weight is never resident whole

    logits_flat = pl.pallas_call(
        output_projection_kernel,
        grid_spec=pltpu.PrefetchScalarGridSpec(
            num_scalar_prefetch=0,
            grid=(rows // r_blk, V // v_blk),
            in_specs=[
                pl.BlockSpec((r_blk, H), lambda r, v: (r, 0)),        # hidden rows
                pl.BlockSpec((H, v_blk), lambda r, v: (0, v)),        # W_out.T tile
                pl.BlockSpec((1, v_blk), lambda r, v: (0, v)),        # bias tile
            ],
            out_specs=pl.BlockSpec((r_blk, v_blk), lambda r, v: (r, v)),
        ),
        out_shape=jax.ShapeDtypeStruct((rows, V), jnp.float32),
        compiler_params=pltpu.CompilerParams(
            dimension_semantics=("parallel", "parallel"),
            vmem_limit_bytes=64 * 1024 * 1024,
        ),
        cost_estimate=pl.CostEstimate(
            flops=2 * rows * H * V,
            transcendentals=0,
            bytes_accessed=4 * (rows * H + H * V + rows * V),
        ),
    )(h_flat, out_weight.T, out_bias.reshape(1, V))

    logits = logits_flat.reshape(B, T, V)    # free view: [B*T, V] row-major == [B, T, V]
    hidden = h_final[None, :, :]             # [1, B, H]
    return logits, hidden


def reference_forward(tokens, cnn_feats, init_h, cell_w, cell_b, out_w, out_b, emb_table):
    """Pure-JAX reference mirroring the PyTorch training-mode loop."""
    B, T = tokens.shape
    all_emb = emb_table[tokens]                              # [B, T, E]
    h = init_h[0]
    logits_seq = []
    for i in range(T):
        x = jnp.concatenate([cnn_feats, all_emb[:, i, :]], axis=1)
        x2 = jnp.concatenate([x, h], axis=1)
        h = jnp.tanh(x2 @ cell_w + cell_b)
        logits_seq.append(h @ out_w.T + out_b)
    return jnp.stack(logits_seq, axis=1), h[None]


if __name__ == "__main__":
    # Small deterministic shapes.
    B, T = 2, 16
    C = 16          # processed CNN feature size
    E = 16          # embedding dim
    H = 32          # hidden state size
    V = 256         # vocabulary size
    input_size = C + E  # RNN cell "input_size"

    key = jax.random.PRNGKey(0)
    k_tok, k_cnn, k_h0, k_w, k_ow, k_ob, k_emb = jax.random.split(key, 7)

    tokens = jax.random.randint(k_tok, (B, T), 0, V, dtype=jnp.int32)
    cnn_feats = jax.random.normal(k_cnn, (B, C), dtype=jnp.float32)
    init_h = jax.random.normal(k_h0, (1, B, H), dtype=jnp.float32)

    # RNNsimpleCell params: variance-scaled weight, zero bias.
    cell_w = (jax.random.normal(k_w, (input_size + H, H), dtype=jnp.float32)
              / jnp.sqrt(jnp.float32(input_size + H)))
    cell_b = jnp.zeros((1, H), dtype=jnp.float32)

    # output_layer = nn.Linear(H, V): uniform(-1/sqrt(H), 1/sqrt(H)).
    bound = 1.0 / jnp.sqrt(jnp.float32(H))
    out_w = jax.random.uniform(k_ow, (V, H), minval=-bound, maxval=bound, dtype=jnp.float32)
    out_b = jax.random.uniform(k_ob, (V,), minval=-bound, maxval=bound, dtype=jnp.float32)

    # embedding_layer = nn.Embedding(V, E): N(0, 1).
    emb_table = jax.random.normal(k_emb, (V, E), dtype=jnp.float32)

    fwd = jax.jit(rnn_one_layer_forward)
    logits, hidden = fwd(tokens, cnn_feats, init_h, cell_w, cell_b, out_w, out_b, emb_table)
    jax.block_until_ready((logits, hidden))

    ref_logits, ref_hidden = reference_forward(
        tokens, cnn_feats, init_h, cell_w, cell_b, out_w, out_b, emb_table)

    assert logits.shape == (B, T, V)
    assert hidden.shape == (1, B, H)
    assert jnp.allclose(logits, ref_logits, atol=1e-4, rtol=1e-4)
    assert jnp.allclose(hidden, ref_hidden, atol=1e-4, rtol=1e-4)

    print("KERNEL_OK")
</pallas_src>

<mosaic_0001>
module attributes {stable_mosaic.version = 11 : i64} {
  func.func @output_projection_kernel(%arg0: i32, %arg1: i32, %arg2: memref<32x32xf32, #tpu.memory_space<vmem>>, %arg3: memref<32x128xf32, #tpu.memory_space<vmem>>, %arg4: memref<1x128xf32, #tpu.memory_space<vmem>>, %arg5: memref<32x128xf32, #tpu.memory_space<vmem>>) attributes {dimension_semantics = [#tpu.dimension_semantics<parallel>, #tpu.dimension_semantics<parallel>], iteration_bounds = array<i64: 1, 2>, scalar_prefetch = 0 : i64, scratch_operands = 0 : i64, tpu.core_type = #tpu.core_type<tc>, window_params = [{transform_indices = @transform_0, window_bounds = array<i64: 32, 32>}, {transform_indices = @transform_1, window_bounds = array<i64: 32, 128>}, {transform_indices = @transform_2, window_bounds = array<i64: 1, 128>}, {transform_indices = @transform_3, window_bounds = array<i64: 32, 128>}]} {
    %c0 = arith.constant 0 : index
    %c0_0 = arith.constant 0 : index
    %0 = vector.load %arg2[%c0, %c0_0] : memref<32x32xf32, #tpu.memory_space<vmem>>, vector<32x32xf32>
    %c0_1 = arith.constant 0 : index
    %c0_2 = arith.constant 0 : index
    %1 = vector.load %arg3[%c0_1, %c0_2] : memref<32x128xf32, #tpu.memory_space<vmem>>, vector<32x128xf32>
    %cst = arith.constant dense<0.000000e+00> : vector<32x128xf32>
    %2 = tpu.matmul %0, %1, %cst {dimension_numbers = #tpu.dot_dimension_numbers<[1], [0], [0], [1], [0, 0, 1, 1], [], []>} : vector<32x32xf32>, vector<32x128xf32>, vector<32x128xf32> -> vector<32x128xf32>
    %c0_3 = arith.constant 0 : index
    %c0_4 = arith.constant 0 : index
    %3 = vector.load %arg4[%c0_3, %c0_4] : memref<1x128xf32, #tpu.memory_space<vmem>>, vector<1x128xf32>
    %4 = vector.broadcast %3 : vector<1x128xf32> to vector<32x128xf32>
    %5 = arith.addf %2, %4 : vector<32x128xf32>
    %c0_5 = arith.constant 0 : index
    %c0_6 = arith.constant 0 : index
    %6 = vector.load %arg5[%c0_5, %c0_6] : memref<32x128xf32, #tpu.memory_space<vmem>>, vector<32x128xf32>
    tpu.vector_store %arg5[%c0_5, %c0_6], %5 {strides = array<i32>} : memref<32x128xf32, #tpu.memory_space<vmem>>, vector<32x128xf32>,
    return
  }
  func.func @transform_0(%arg0: i32, %arg1: i32) -> (i32, i32) {
    %c0_i32 = arith.constant 0 : i32
    %c0_i32_0 = arith.constant 0 : i32
    return %arg0, %c0_i32 : i32, i32
  }
  func.func @transform_1(%arg0: i32, %arg1: i32) -> (i32, i32) {
    %c0_i32 = arith.constant 0 : i32
    %c0_i32_0 = arith.constant 0 : i32
    return %c0_i32, %arg1 : i32, i32
  }
  func.func @transform_2(%arg0: i32, %arg1: i32) -> (i32, i32) {
    %c0_i32 = arith.constant 0 : i32
    %c0_i32_0 = arith.constant 0 : i32
    return %c0_i32, %arg1 : i32, i32
  }
  func.func @transform_3(%arg0: i32, %arg1: i32) -> (i32, i32) {
    %c0_i32 = arith.constant 0 : i32
    return %arg0, %arg1 : i32, i32
  }
}

module attributes {stable_mosaic.version = 11 : i64} {
  func.func @rnn_recurrence_kernel(%arg0: i32, %arg1: memref<8x2x32xf32, #tpu.memory_space<vmem>>, %arg2: memref<2x32xf32, #tpu.memory_space<vmem>>, %arg3: memref<32x32xf32, #tpu.memory_space<vmem>>, %arg4: memref<2x8x32xf32, #tpu.memory_space<vmem>>, %arg5: memref<2x32xf32, #tpu.memory_space<vmem>>, %arg6: memref<2x32xf32, #tpu.memory_space<vmem>>) attributes {dimension_semantics = [#tpu.dimension_semantics<arbitrary>], iteration_bounds = array<i64: 2>, scalar_prefetch = 0 : i64, scratch_operands = 1 : i64, tpu.core_type = #tpu.core_type<tc>, window_params = [{transform_indices = @transform_0, window_bounds = array<i64: 8, 2, 32>}, {pipeline_mode = #tpu.pipeline_mode<synchronous>, transform_indices = @transform_1, window_bounds = array<i64: 2, 32>}, {pipeline_mode = #tpu.pipeline_mode<synchronous>, transform_indices = @transform_2, window_bounds = array<i64: 32, 32>}, {transform_indices = @transform_3, window_bounds = array<i64: 2, 8, 32>}, {pipeline_mode = #tpu.pipeline_mode<synchronous>, transform_indices = @transform_4, window_bounds = array<i64: 2, 32>}]} {
    %c0_i32 = arith.constant 0 : i32
    %0 = arith.cmpi eq, %arg0, %c0_i32 : i32
    %1 = arith.extui %0 : i1 to i32
    %c0_i32_0 = arith.constant 0 : i32
    %2 = arith.cmpi ne, %1, %c0_i32_0 : i32
    scf.if %2 {
      %c0_83 = arith.constant 0 : index
      %c0_84 = arith.constant 0 : index
      %87 = vector.load %arg2[%c0_83, %c0_84] : memref<2x32xf32, #tpu.memory_space<vmem>>, vector<2x32xf32>
      %c0_85 = arith.constant 0 : index
      %c0_86 = arith.constant 0 : index
      %88 = vector.load %arg6[%c0_85, %c0_86] : memref<2x32xf32, #tpu.memory_space<vmem>>, vector<2x32xf32>
      tpu.vector_store %arg6[%c0_85, %c0_86], %87 {strides = array<i32>} : memref<2x32xf32, #tpu.memory_space<vmem>>, vector<2x32xf32>,
    } else {
    }
    %c0 = arith.constant 0 : index
    %c0_1 = arith.constant 0 : index
    %3 = vector.load %arg3[%c0, %c0_1] : memref<32x32xf32, #tpu.memory_space<vmem>>, vector<32x32xf32>
    %c0_2 = arith.constant 0 : index
    %c0_3 = arith.constant 0 : index
    %4 = vector.load %arg6[%c0_2, %c0_3] : memref<2x32xf32, #tpu.memory_space<vmem>>, vector<2x32xf32>
    %c0_4 = arith.constant 0 : index
    %c0_5 = arith.constant 0 : index
    %c0_6 = arith.constant 0 : index
    %5 = vector.load %arg1[%c0_4, %c0_5, %c0_6] : memref<8x2x32xf32, #tpu.memory_space<vmem>>, vector<1x2x32xf32>
    %6 = vector.shape_cast %5 : vector<1x2x32xf32> to vector<2x32xf32>
    %cst = arith.constant dense<0.000000e+00> : vector<2x32xf32>
    %7 = tpu.matmul %4, %3, %cst {dimension_numbers = #tpu.dot_dimension_numbers<[1], [0], [0], [1], [0, 0, 1, 1], [], []>} : vector<2x32xf32>, vector<32x32xf32>, vector<2x32xf32> -> vector<2x32xf32>
    %8 = arith.addf %6, %7 : vector<2x32xf32>
    %9 = math.tanh %8 : vector<2x32xf32>
    %c0_7 = arith.constant 0 : index
    %c0_8 = arith.constant 0 : index
    %10 = vector.load %arg6[%c0_7, %c0_8] : memref<2x32xf32, #tpu.memory_space<vmem>>, vector<2x32xf32>
    tpu.vector_store %arg6[%c0_7, %c0_8], %9 {strides = array<i32>} : memref<2x32xf32, #tpu.memory_space<vmem>>, vector<2x32xf32>,
    %c0_9 = arith.constant 0 : index
    %c0_10 = arith.constant 0 : index
    %c0_11 = arith.constant 0 : index
    %11 = vector.load %arg4[%c0_9, %c0_10, %c0_11] : memref<2x8x32xf32, #tpu.memory_space<vmem>>, vector<2x1x32xf32>
    %12 = vector.shape_cast %11 : vector<2x1x32xf32> to vector<2x32xf32>
    %13 = vector.shape_cast %9 : vector<2x32xf32> to vector<2x1x32xf32>
    tpu.vector_store %arg4[%c0_9, %c0_10, %c0_11], %13 {strides = array<i32>} : memref<2x8x32xf32, #tpu.memory_space<vmem>>, vector<2x1x32xf32>,
    %c0_12 = arith.constant 0 : index
    %c0_13 = arith.constant 0 : index
    %14 = vector.load %arg6[%c0_12, %c0_13] : memref<2x32xf32, #tpu.memory_space<vmem>>, vector<2x32xf32>
    %c1 = arith.constant 1 : index
    %c0_14 = arith.constant 0 : index
    %c0_15 = arith.constant 0 : index
    %15 = vector.load %arg1[%c1, %c0_14, %c0_15] : memref<8x2x32xf32, #tpu.memory_space<vmem>>, vector<1x2x32xf32>
    %16 = vector.shape_cast %15 : vector<1x2x32xf32> to vector<2x32xf32>
    %cst_16 = arith.constant dense<0.000000e+00> : vector<2x32xf32>
    %17 = tpu.matmul %14, %3, %cst_16 {dimension_numbers = #tpu.dot_dimension_numbers<[1], [0], [0], [1], [0, 0, 1, 1], [], []>} : vector<2x32xf32>, vector<32x32xf32>, vector<2x32xf32> -> vector<2x32xf32>
    %18 = arith.addf %16, %17 : vector<2x32xf32>
    %19 = math.tanh %18 : vector<2x32xf32>
    %c0_17 = arith.constant 0 : index
    %c0_18 = arith.constant 0 : index
    %20 = vector.load %arg6[%c0_17, %c0_18] : memref<2x32xf32, #tpu.memory_space<vmem>>, vector<2x32xf32>
    tpu.vector_store %arg6[%c0_17, %c0_18], %19 {strides = array<i32>} : memref<2x32xf32, #tpu.memory_space<vmem>>, vector<2x32xf32>,
    %c0_19 = arith.constant 0 : index
    %c1_20 = arith.constant 1 : index
    %c0_21 = arith.constant 0 : index
    %21 = vector.load %arg4[%c0_19, %c1_20, %c0_21] : memref<2x8x32xf32, #tpu.memory_space<vmem>>, vector<2x1x32xf32>
    %22 = vector.shape_cast %21 : vector<2x1x32xf32> to vector<2x32xf32>
    %23 = vector.shape_cast %19 : vector<2x32xf32> to vector<2x1x32xf32>
    tpu.vector_store %arg4[%c0_19, %c1_20, %c0_21], %23 {strides = array<i32>} : memref<2x8x32xf32, #tpu.memory_space<vmem>>, vector<2x1x32xf32>,
    %c0_22 = arith.constant 0 : index
    %c0_23 = arith.constant 0 : index
    %24 = vector.load %arg6[%c0_22, %c0_23] : memref<2x32xf32, #tpu.memory_space<vmem>>, vector<2x32xf32>
    %c2 = arith.constant 2 : index
    %c0_24 = arith.constant 0 : index
    %c0_25 = arith.constant 0 : index
    %25 = vector.load %arg1[%c2, %c0_24, %c0_25] : memref<8x2x32xf32, #tpu.memory_space<vmem>>, vector<1x2x32xf32>
    %26 = vector.shape_cast %25 : vector<1x2x32xf32> to vector<2x32xf32>
    %cst_26 = arith.constant dense<0.000000e+00> : vector<2x32xf32>
    %27 = tpu.matmul %24, %3, %cst_26 {dimension_numbers = #tpu.dot_dimension_numbers<[1], [0], [0], [1], [0, 0, 1, 1], [], []>} : vector<2x32xf32>, vector<32x32xf32>, vector<2x32xf32> -> vector<2x32xf32>
    %28 = arith.addf %26, %27 : vector<2x32xf32>
    %29 = math.tanh %28 : vector<2x32xf32>
    %c0_27 = arith.constant 0 : index
    %c0_28 = arith.constant 0 : index
    %30 = vector.load %arg6[%c0_27, %c0_28] : memref<2x32xf32, #tpu.memory_space<vmem>>, vector<2x32xf32>
    tpu.vector_store %arg6[%c0_27, %c0_28], %29 {strides = array<i32>} : memref<2x32xf32, #tpu.memory_space<vmem>>, vector<2x32xf32>,
    %c0_29 = arith.constant 0 : index
    %c2_30 = arith.constant 2 : index
    %c0_31 = arith.constant 0 : index
    %31 = vector.load %arg4[%c0_29, %c2_30, %c0_31] : memref<2x8x32xf32, #tpu.memory_space<vmem>>, vector<2x1x32xf32>
    %32 = vector.shape_cast %31 : vector<2x1x32xf32> to vector<2x32xf32>
    %33 = vector.shape_cast %29 : vector<2x32xf32> to vector<2x1x32xf32>
    tpu.vector_store %arg4[%c0_29, %c2_30, %c0_31], %33 {strides = array<i32>} : memref<2x8x32xf32, #tpu.memory_space<vmem>>, vector<2x1x32xf32>,
    %c0_32 = arith.constant 0 : index
    %c0_33 = arith.constant 0 : index
    %34 = vector.load %arg6[%c0_32, %c0_33] : memref<2x32xf32, #tpu.memory_space<vmem>>, vector<2x32xf32>
    %c3 = arith.constant 3 : index
    %c0_34 = arith.constant 0 : index
    %c0_35 = arith.constant 0 : index
    %35 = vector.load %arg1[%c3, %c0_34, %c0_35] : memref<8x2x32xf32, #tpu.memory_space<vmem>>, vector<1x2x32xf32>
    %36 = vector.shape_cast %35 : vector<1x2x32xf32> to vector<2x32xf32>
    %cst_36 = arith.constant dense<0.000000e+00> : vector<2x32xf32>
    %37 = tpu.matmul %34, %3, %cst_36 {dimension_numbers = #tpu.dot_dimension_numbers<[1], [0], [0], [1], [0, 0, 1, 1], [], []>} : vector<2x32xf32>, vector<32x32xf32>, vector<2x32xf32> -> vector<2x32xf32>
    %38 = arith.addf %36, %37 : vector<2x32xf32>
    %39 = math.tanh %38 : vector<2x32xf32>
    %c0_37 = arith.constant 0 : index
    %c0_38 = arith.constant 0 : index
    %40 = vector.load %arg6[%c0_37, %c0_38] : memref<2x32xf32, #tpu.memory_space<vmem>>, vector<2x32xf32>
    tpu.vector_store %arg6[%c0_37, %c0_38], %39 {strides = array<i32>} : memref<2x32xf32, #tpu.memory_space<vmem>>, vector<2x32xf32>,
    %c0_39 = arith.constant 0 : index
    %c3_40 = arith.constant 3 : index
    %c0_41 = arith.constant 0 : index
    %41 = vector.load %arg4[%c0_39, %c3_40, %c0_41] : memref<2x8x32xf32, #tpu.memory_space<vmem>>, vector<2x1x32xf32>
    %42 = vector.shape_cast %41 : vector<2x1x32xf32> to vector<2x32xf32>
    %43 = vector.shape_cast %39 : vector<2x32xf32> to vector<2x1x32xf32>
    tpu.vector_store %arg4[%c0_39, %c3_40, %c0_41], %43 {strides = array<i32>} : memref<2x8x32xf32, #tpu.memory_space<vmem>>, vector<2x1x32xf32>,
    %c0_42 = arith.constant 0 : index
    %c0_43 = arith.constant 0 : index
    %44 = vector.load %arg6[%c0_42, %c0_43] : memref<2x32xf32, #tpu.memory_space<vmem>>, vector<2x32xf32>
    %c4 = arith.constant 4 : index
    %c0_44 = arith.constant 0 : index
    %c0_45 = arith.constant 0 : index
    %45 = vector.load %arg1[%c4, %c0_44, %c0_45] : memref<8x2x32xf32, #tpu.memory_space<vmem>>, vector<1x2x32xf32>
    %46 = vector.shape_cast %45 : vector<1x2x32xf32> to vector<2x32xf32>
    %cst_46 = arith.constant dense<0.000000e+00> : vector<2x32xf32>
    %47 = tpu.matmul %44, %3, %cst_46 {dimension_numbers = #tpu.dot_dimension_numbers<[1], [0], [0], [1], [0, 0, 1, 1], [], []>} : vector<2x32xf32>, vector<32x32xf32>, vector<2x32xf32> -> vector<2x32xf32>
    %48 = arith.addf %46, %47 : vector<2x32xf32>
    %49 = math.tanh %48 : vector<2x32xf32>
    %c0_47 = arith.constant 0 : index
    %c0_48 = arith.constant 0 : index
    %50 = vector.load %arg6[%c0_47, %c0_48] : memref<2x32xf32, #tpu.memory_space<vmem>>, vector<2x32xf32>
    tpu.vector_store %arg6[%c0_47, %c0_48], %49 {strides = array<i32>} : memref<2x32xf32, #tpu.memory_space<vmem>>, vector<2x32xf32>,
    %c0_49 = arith.constant 0 : index
    %c4_50 = arith.constant 4 : index
    %c0_51 = arith.constant 0 : index
    %51 = vector.load %arg4[%c0_49, %c4_50, %c0_51] : memref<2x8x32xf32, #tpu.memory_space<vmem>>, vector<2x1x32xf32>
    %52 = vector.shape_cast %51 : vector<2x1x32xf32> to vector<2x32xf32>
    %53 = vector.shape_cast %49 : vector<2x32xf32> to vector<2x1x32xf32>
    tpu.vector_store %arg4[%c0_49, %c4_50, %c0_51], %53 {strides = array<i32>} : memref<2x8x32xf32, #tpu.memory_space<vmem>>, vector<2x1x32xf32>,
    %c0_52 = arith.constant 0 : index
    %c0_53 = arith.constant 0 : index
    %54 = vector.load %arg6[%c0_52, %c0_53] : memref<2x32xf32, #tpu.memory_space<vmem>>, vector<2x32xf32>
    %c5 = arith.constant 5 : index
    %c0_54 = arith.constant 0 : index
    %c0_55 = arith.constant 0 : index
    %55 = vector.load %arg1[%c5, %c0_54, %c0_55] : memref<8x2x32xf32, #tpu.memory_space<vmem>>, vector<1x2x32xf32>
    %56 = vector.shape_cast %55 : vector<1x2x32xf32> to vector<2x32xf32>
    %cst_56 = arith.constant dense<0.000000e+00> : vector<2x32xf32>
    %57 = tpu.matmul %54, %3, %cst_56 {dimension_numbers = #tpu.dot_dimension_numbers<[1], [0], [0], [1], [0, 0, 1, 1], [], []>} : vector<2x32xf32>, vector<32x32xf32>, vector<2x32xf32> -> vector<2x32xf32>
    %58 = arith.addf %56, %57 : vector<2x32xf32>
    %59 = math.tanh %58 : vector<2x32xf32>
    %c0_57 = arith.constant 0 : index
    %c0_58 = arith.constant 0 : index
    %60 = vector.load %arg6[%c0_57, %c0_58] : memref<2x32xf32, #tpu.memory_space<vmem>>, vector<2x32xf32>
    tpu.vector_store %arg6[%c0_57, %c0_58], %59 {strides = array<i32>} : memref<2x32xf32, #tpu.memory_space<vmem>>, vector<2x32xf32>,
    %c0_59 = arith.constant 0 : index
    %c5_60 = arith.constant 5 : index
    %c0_61 = arith.constant 0 : index
    %61 = vector.load %arg4[%c0_59, %c5_60, %c0_61] : memref<2x8x32xf32, #tpu.memory_space<vmem>>, vector<2x1x32xf32>
    %62 = vector.shape_cast %61 : vector<2x1x32xf32> to vector<2x32xf32>
    %63 = vector.shape_cast %59 : vector<2x32xf32> to vector<2x1x32xf32>
    tpu.vector_store %arg4[%c0_59, %c5_60, %c0_61], %63 {strides = array<i32>} : memref<2x8x32xf32, #tpu.memory_space<vmem>>, vector<2x1x32xf32>,
    %c0_62 = arith.constant 0 : index
    %c0_63 = arith.constant 0 : index
    %64 = vector.load %arg6[%c0_62, %c0_63] : memref<2x32xf32, #tpu.memory_space<vmem>>, vector<2x32xf32>
    %c6 = arith.constant 6 : index
    %c0_64 = arith.constant 0 : index
    %c0_65 = arith.constant 0 : index
    %65 = vector.load %arg1[%c6, %c0_64, %c0_65] : memref<8x2x32xf32, #tpu.memory_space<vmem>>, vector<1x2x32xf32>
    %66 = vector.shape_cast %65 : vector<1x2x32xf32> to vector<2x32xf32>
    %cst_66 = arith.constant dense<0.000000e+00> : vector<2x32xf32>
    %67 = tpu.matmul %64, %3, %cst_66 {dimension_numbers = #tpu.dot_dimension_numbers<[1], [0], [0], [1], [0, 0, 1, 1], [], []>} : vector<2x32xf32>, vector<32x32xf32>, vector<2x32xf32> -> vector<2x32xf32>
    %68 = arith.addf %66, %67 : vector<2x32xf32>
    %69 = math.tanh %68 : vector<2x32xf32>
    %c0_67 = arith.constant 0 : index
    %c0_68 = arith.constant 0 : index
    %70 = vector.load %arg6[%c0_67, %c0_68] : memref<2x32xf32, #tpu.memory_space<vmem>>, vector<2x32xf32>
    tpu.vector_store %arg6[%c0_67, %c0_68], %69 {strides = array<i32>} : memref<2x32xf32, #tpu.memory_space<vmem>>, vector<2x32xf32>,
    %c0_69 = arith.constant 0 : index
    %c6_70 = arith.constant 6 : index
    %c0_71 = arith.constant 0 : index
    %71 = vector.load %arg4[%c0_69, %c6_70, %c0_71] : memref<2x8x32xf32, #tpu.memory_space<vmem>>, vector<2x1x32xf32>
    %72 = vector.shape_cast %71 : vector<2x1x32xf32> to vector<2x32xf32>
    %73 = vector.shape_cast %69 : vector<2x32xf32> to vector<2x1x32xf32>
    tpu.vector_store %arg4[%c0_69, %c6_70, %c0_71], %73 {strides = array<i32>} : memref<2x8x32xf32, #tpu.memory_space<vmem>>, vector<2x1x32xf32>,
    %c0_72 = arith.constant 0 : index
    %c0_73 = arith.constant 0 : index
    %74 = vector.load %arg6[%c0_72, %c0_73] : memref<2x32xf32, #tpu.memory_space<vmem>>, vector<2x32xf32>
    %c7 = arith.constant 7 : index
    %c0_74 = arith.constant 0 : index
    %c0_75 = arith.constant 0 : index
    %75 = vector.load %arg1[%c7, %c0_74, %c0_75] : memref<8x2x32xf32, #tpu.memory_space<vmem>>, vector<1x2x32xf32>
    %76 = vector.shape_cast %75 : vector<1x2x32xf32> to vector<2x32xf32>
    %cst_76 = arith.constant dense<0.000000e+00> : vector<2x32xf32>
    %77 = tpu.matmul %74, %3, %cst_76 {dimension_numbers = #tpu.dot_dimension_numbers<[1], [0], [0], [1], [0, 0, 1, 1], [], []>} : vector<2x32xf32>, vector<32x32xf32>, vector<2x32xf32> -> vector<2x32xf32>
    %78 = arith.addf %76, %77 : vector<2x32xf32>
    %79 = math.tanh %78 : vector<2x32xf32>
    %c0_77 = arith.constant 0 : index
    %c0_78 = arith.constant 0 : index
    %80 = vector.load %arg6[%c0_77, %c0_78] : memref<2x32xf32, #tpu.memory_space<vmem>>, vector<2x32xf32>
    tpu.vector_store %arg6[%c0_77, %c0_78], %79 {strides = array<i32>} : memref<2x32xf32, #tpu.memory_space<vmem>>, vector<2x32xf32>,
    %c0_79 = arith.constant 0 : index
    %c7_80 = arith.constant 7 : index
    %c0_81 = arith.constant 0 : index
    %81 = vector.load %arg4[%c0_79, %c7_80, %c0_81] : memref<2x8x32xf32, #tpu.memory_space<vmem>>, vector<2x1x32xf32>
    %82 = vector.shape_cast %81 : vector<2x1x32xf32> to vector<2x32xf32>
    %83 = vector.shape_cast %79 : vector<2x32xf32> to vector<2x1x32xf32>
    tpu.vector_store %arg4[%c0_79, %c7_80, %c0_81], %83 {strides = array<i32>} : memref<2x8x32xf32, #tpu.memory_space<vmem>>, vector<2x1x32xf32>,
    %c1_i32 = arith.constant 1 : i32
    %84 = arith.cmpi eq, %arg0, %c1_i32 : i32
    %85 = arith.extui %84 : i1 to i32
    %c0_i32_82 = arith.constant 0 : i32
    %86 = arith.cmpi ne, %85, %c0_i32_82 : i32
    scf.if %86 {
      %c0_83 = arith.constant 0 : index
      %c0_84 = arith.constant 0 : index
      %87 = vector.load %arg6[%c0_83, %c0_84] : memref<2x32xf32, #tpu.memory_space<vmem>>, vector<2x32xf32>
      %c0_85 = arith.constant 0 : index
      %c0_86 = arith.constant 0 : index
      %88 = vector.load %arg5[%c0_85, %c0_86] : memref<2x32xf32, #tpu.memory_space<vmem>>, vector<2x32xf32>
      tpu.vector_store %arg5[%c0_85, %c0_86], %87 {strides = array<i32>} : memref<2x32xf32, #tpu.memory_space<vmem>>, vector<2x32xf32>,
    } else {
    }
    return
  }
  func.func @transform_0(%arg0: i32) -> (i32, i32, i32) {
    %c0_i32 = arith.constant 0 : i32
    %c0_i32_0 = arith.constant 0 : i32
    %c0_i32_1 = arith.constant 0 : i32
    return %arg0, %c0_i32, %c0_i32_0 : i32, i32, i32
  }
  func.func @transform_1(%arg0: i32) -> (i32, i32) {
    %c0_i32 = arith.constant 0 : i32
    %c0_i32_0 = arith.constant 0 : i32
    %c0_i32_1 = arith.constant 0 : i32
    return %c0_i32, %c0_i32_0 : i32, i32
  }
  func.func @transform_2(%arg0: i32) -> (i32, i32) {
    %c0_i32 = arith.constant 0 : i32
    %c0_i32_0 = arith.constant 0 : i32
    %c0_i32_1 = arith.constant 0 : i32
    return %c0_i32, %c0_i32_0 : i32, i32
  }
  func.func @transform_3(%arg0: i32) -> (i32, i32, i32) {
    %c0_i32 = arith.constant 0 : i32
    %c0_i32_0 = arith.constant 0 : i32
    %c0_i32_1 = arith.constant 0 : i32
    return %c0_i32, %arg0, %c0_i32_0 : i32, i32, i32
  }
  func.func @transform_4(%arg0: i32) -> (i32, i32) {
    %c0_i32 = arith.constant 0 : i32
    %c0_i32_0 = arith.constant 0 : i32
    %c0_i32_1 = arith.constant 0 : i32
    return %c0_i32, %c0_i32_0 : i32, i32
  }
}

</mosaic_0001>

<llo_original>
// kernel: rnn_one_layer_forward.3
$region0: #{rnn_one_layer_forward.3}
  #allocation0 [shape = 'u32[]', space=smem, size = 0x4, offset = 0x4, fixed_abs, tag = 'smem constant byte address 0x4 - core index']
  #allocation1 [shape = 'u32[144,128]{1,0:T(1,128)}', space=vmem, size = 0x12000, scoped, tag = 'internal scratch']
  %s0 = inlined_call_operand.hbm [shape: f32[32,32], index: 0, kind: input, shape index: {}]
  %s1 = inlined_call_operand.hbm [shape: f32[32,256], index: 1, kind: input, shape index: {}]
  %s2 = inlined_call_operand.hbm [shape: f32[1,256], index: 2, kind: input, shape index: {}]
  %s3 = inlined_call_operand.hbm [shape: f32[32,256], index: 3, kind: output, shape index: {}]
  %s4 = sld [smem:[#allocation0]]
  $region57: #{rnn_one_layer_forward.3} parent=0
    _
  %s6 = ssub.s32 1, %s4
  %s7 = scalar_select 0, %s6, %s4
  $region1: #{rnn_one_layer_forward.3} parent=0
    #allocation2 [shape = 'u8[16384]{0}', space=vmem, size = 0x4000, scoped, tag = 'input window, operand 0, single buffered']
    #allocation3 [shape = 's32[2]{0}', space=sflag, size = 0x8, scoped, tag = 'scoped memory for rnn_one_layer_forward.3']
    #allocation4 [shape = 's32[2]{0}', space=sflag, size = 0x8, scoped, tag = 'scoped memory for rnn_one_layer_forward.3']
    #allocation5 [shape = 'u8[32768]{0}', space=vmem, size = 0x8000, scoped, tag = 'input window, operand 1']
    #allocation6 [shape = 's32[2]{0}', space=sflag, size = 0x8, scoped, tag = 'scoped memory for rnn_one_layer_forward.3']
    #allocation7 [shape = 'u8[1024]{0}', space=vmem, size = 0x400, scoped, tag = 'input window, operand 2']
    #allocation8 [shape = 'u8[32768]{0}', space=vmem, size = 0x8000, scoped, tag = 'output window, operand 0']
    %8 = vsyncpa [#allocation3], 0
    %9 = vsyncpa [#allocation6], 0
    %s10 = scalar_lea.sflag [#allocation6], 1
    %11 = vsyncpa %s10, 0
    %12 = vsyncpa [#allocation4], 0
    %s13 = scalar_lea.sflag [#allocation4], 1
    %14 = vsyncpa %s13, 0
    loop: start=0, step=1, limit=4
    $region2: #{rnn_one_layer_forward.3} parent=1 // loop_pre_header
      _
    $region3: #{rnn_one_layer_forward.3} parent=1 // loop_header
      %s16 = sphi 0, %s20
      %p17 = scmp.ge.s32.totalorder %s16, 4
      %s23 = sphi 0, %s35
      %s24 = sphi 0, %s31
      %s25 = sphi 0, %s23
      %s26 = sphi 0, %s24
      %s27 = sphi 0, %s25
      %s28 = sphi 0, %s26
      %s38 = sphi 0, %s40
      %s41 = sphi 0, %s38
      %s42 = sphi 0, %s41
      %s58 = sphi 0, %s42
      %s64 = sphi 0, %s66
      %s67 = sphi 0, %s64
      %s68 = sphi 0, %s67
      %s84 = sphi 0, %s68
      %s90 = sphi 0, %s92
      %s93 = sphi 0, %s90
      %s94 = sphi 0, %s93
      %s110 = sphi 0, %s94
      %s118 = sphi 0, %s120
      %s121 = sphi 0, %s118
      %s122 = sphi 0, %s121
      %s138 = sphi 0, %s122
    $region4: #{rnn_one_layer_forward.3} parent=1 // loop_header_branch
      %19 = sbr.rel (%p17) target = $region8
    $region5: #{rnn_one_layer_forward.3} parent=1 // loop_body
      %s21 = ssub.s32 %s16, 1
      %s22 = ssub.s32 %s16, 2
      %s29 = sadd.s32 1, %s24
      %p30 = scmp.ge.s32.totalorder %s29, 2
      %s31 = scalar_select %p30, 0, %s29
      %s32 = sadd.s32 1, %s23
      %s33 = scalar_select %p30, %s32, %s23
      %p34 = scmp.ge.s32.totalorder %s33, 1
      %s35 = scalar_select %p34, 0, %s33
      %s36 = ssub.s32 %s23, %s35
      %p37 = scmp.eq.s32.totalorder %s36, 0
      %s39 = sadd.s32 %s38, 1
      %s40 = scalar_select %p37, %s38, %s39
      %p43 = pneg %p37
      %p44 = scmp.eq.s32.totalorder %s16, 1
      %p45 = por %p43, %p44
      %p46 = scmp.ne.s32.totalorder %s38, %s41
      %p47 = scmp.eq.s32.totalorder %s16, 0
      %p48 = por %p46, %p47
      %p49 = scmp.ne.s32.totalorder %s38, %s41
      %p50 = scmp.eq.s32.totalorder %s21, 1
      %p51 = por %p49, %p50
      %p52 = scmp.ne.s32.totalorder %s41, %s42
      %p53 = scmp.eq.s32.totalorder %s21, 0
      %p54 = por %p52, %p53
      %p55 = scmp.ne.s32.totalorder %s41, %s42
      %p56 = scmp.eq.s32.totalorder %s22, 1
      %p57 = por %p55, %p56
      %p59 = scmp.ne.s32.totalorder %s42, %s58
      %p60 = scmp.eq.s32.totalorder %s22, 0
      %p61 = por %p59, %p60
      %s62 = ssub.s32 %s24, %s31
      %p63 = scmp.eq.s32.totalorder %s62, 0
      %s65 = sadd.s32 %s64, 1
      %s66 = scalar_select %p63, %s64, %s65
      %p69 = pneg %p63
      %p70 = scmp.eq.s32.totalorder %s16, 1
      %p71 = por %p69, %p70
      %p72 = scmp.ne.s32.totalorder %s64, %s67
      %p73 = scmp.eq.s32.totalorder %s16, 0
      %p74 = por %p72, %p73
      %p75 = scmp.ne.s32.totalorder %s64, %s67
      %p76 = scmp.eq.s32.totalorder %s21, 1
      %p77 = por %p75, %p76
      %p78 = scmp.ne.s32.totalorder %s67, %s68
      %p79 = scmp.eq.s32.totalorder %s21, 0
      %p80 = por %p78, %p79
      %p81 = scmp.ne.s32.totalorder %s67, %s68
      %p82 = scmp.eq.s32.totalorder %s22, 1
      %p83 = por %p81, %p82
      %p85 = scmp.ne.s32.totalorder %s68, %s84
      %p86 = scmp.eq.s32.totalorder %s22, 0
      %p87 = por %p85, %p86
      %s88 = ssub.s32 %s24, %s31
      %p89 = scmp.eq.s32.totalorder %s88, 0
      %s91 = sadd.s32 %s90, 1
      %s92 = scalar_select %p89, %s90, %s91
      %p95 = pneg %p89
      %p96 = scmp.eq.s32.totalorder %s16, 1
      %p97 = por %p95, %p96
      %p98 = scmp.ne.s32.totalorder %s90, %s93
      %p99 = scmp.eq.s32.totalorder %s16, 0
      %p100 = por %p98, %p99
      %p101 = scmp.ne.s32.totalorder %s90, %s93
      %p102 = scmp.eq.s32.totalorder %s21, 1
      %p103 = por %p101, %p102
      %p104 = scmp.ne.s32.totalorder %s93, %s94
      %p105 = scmp.eq.s32.totalorder %s21, 0
      %p106 = por %p104, %p105
      %p107 = scmp.ne.s32.totalorder %s93, %s94
      %p108 = scmp.eq.s32.totalorder %s22, 1
      %p109 = por %p107, %p108
      %p111 = scmp.ne.s32.totalorder %s94, %s110
      %p112 = scmp.eq.s32.totalorder %s22, 0
      %p113 = por %p111, %p112
      %s114 = ssub.s32 %s23, %s35
      %s115 = ssub.s32 %s24, %s31
      %s116 = sor.u32 %s114, %s115
      %p117 = scmp.eq.s32.totalorder %s116, 0
      %s119 = sadd.s32 %s118, 1
      %s120 = scalar_select %p117, %s118, %s119
      %p123 = pneg %p117
      %p124 = scmp.eq.s32.totalorder %s16, 1
      %p125 = por %p123, %p124
      %p126 = scmp.ne.s32.totalorder %s118, %s121
      %p127 = scmp.eq.s32.totalorder %s16, 0
      %p128 = por %p126, %p127
      %p129 = scmp.ne.s32.totalorder %s118, %s121
      %p130 = scmp.eq.s32.totalorder %s21, 1
      %p131 = por %p129, %p130
      %p132 = scmp.ne.s32.totalorder %s121, %s122
      %p133 = scmp.eq.s32.totalorder %s21, 0
      %p134 = por %p132, %p133
      %p135 = scmp.ne.s32.totalorder %s121, %s122
      %p136 = scmp.eq.s32.totalorder %s22, 1
      %p137 = por %p135, %p136
      %p139 = scmp.ne.s32.totalorder %s122, %s138
      %p140 = scmp.eq.s32.totalorder %s22, 0
      %p141 = por %p139, %p140
      %p142 = scmp.le.s32.totalorder 1, %s16
      %p143 = scmp.lt.s32.totalorder %s16, 3
      %p144 = pnand %p142, %p143
      %p145 = pneg %p144
      // Predicated region
      $region9: #{rnn_one_layer_forward.3} parent=5 // pred_check
        _
      $region10: #{rnn_one_layer_forward.3} parent=5 // pred_check_branch
        %147 = sbr.rel (%p144) target = $region12
      $region11: #{rnn_one_layer_forward.3} parent=5 // pred_region
        %s148 = ssub.s32 %s16, 1
        // Predicated region
        $region13: #{rnn_one_layer_forward.3} parent=11 // pred_check
          %p149 = pneg %p54
        $region14: #{rnn_one_layer_forward.3} parent=11 // pred_check_branch
          %151 = sbr.rel (%p149) target = $region16
        $region15: #{rnn_one_layer_forward.3} parent=11 // pred_region
          %s152 = smul.u32 4, %s25
          %s154 = ssub.s32 512, 512
          %155 = vsyncadd [#allocation3], %s154
          %s156 = smul.addr %s152, 128
          %s157 = scalar_lea.hbm %s0, %s156
          %s158 = sshll.u32 [#allocation2], 4
          %s159 = int_to_ptr.vmem [resolvable:$true] %s158
          %164 = dma.hbm_to_vmem [thread:$0]  %s157, 512, %s159, [#allocation3], 128, 128, 8
        $region16: #{rnn_one_layer_forward.3} parent=11 // pred_fallthru
          _
      $region12: #{rnn_one_layer_forward.3} parent=5 // pred_fallthru
        _
      %p165 = scmp.lt.s32.totalorder %s16, 2
      // Predicated region
      $region17: #{rnn_one_layer_forward.3} parent=5 // pred_check
        %p166 = pneg %p165
      $region18: #{rnn_one_layer_forward.3} parent=5 // pred_check_branch
        %168 = sbr.rel (%p166) target = $region20
      $region19: #{rnn_one_layer_forward.3} parent=5 // pred_region
        // Predicated region
        $region21: #{rnn_one_layer_forward.3} parent=19 // pred_check
          %p169 = pneg %p74
        $region22: #{rnn_one_layer_forward.3} parent=19 // pred_check_branch
          %171 = sbr.rel (%p169) target = $region24
        $region23: #{rnn_one_layer_forward.3} parent=19 // pred_region
          %s172 = sand.u32 %s16, 1
          %s173 = scalar_lea.sflag [#allocation6], %s172
          %s174 = sand.u32 %s64, 1
          %s175 = smul.addr %s174, 32
          %s176 = scalar_lea.vmem [#allocation5], %s175
          %s178 = ssub.s32 512, 512
          %179 = vsyncadd %s173, %s178
          %s180 = smul.addr %s24, 128
          %s181 = scalar_lea.hbm %s1, %s180
          %s182 = sshll.u32 %s176, 4
          %s183 = int_to_ptr.vmem [resolvable:$true] %s182
          %188 = dma.hbm_to_vmem [thread:$0]  %s181, 512, %s183, %s173, 256, 128, 8
        $region24: #{rnn_one_layer_forward.3} parent=19 // pred_fallthru
          _
        // Predicated region
        $region25: #{rnn_one_layer_forward.3} parent=19 // pred_check
          %p189 = pneg %p100
        $region26: #{rnn_one_layer_forward.3} parent=19 // pred_check_branch
          %191 = sbr.rel (%p189) target = $region28
        $region27: #{rnn_one_layer_forward.3} parent=19 // pred_region
          %s192 = sand.u32 %s16, 1
          %s193 = scalar_lea.sflag [#allocation6], %s192
          %s194 = sand.u32 %s90, 1
          %s195 = scalar_lea.vmem [#allocation7], %s194
          %s197 = ssub.s32 16, 16
          %198 = vsyncadd %s193, %s197
          %s199 = smul.addr %s24, 16
          %s200 = scalar_lea.hbm %s2, %s199
          %s202 = sshll.u32 %s195, 4
          %s203 = int_to_ptr.vmem [resolvable:$true] %s202
          %205 = dma.hbm_to_vmem [thread:$0]  %s200, 16, %s203, %s193
        $region28: #{rnn_one_layer_forward.3} parent=19 // pred_fallthru
          _
      $region20: #{rnn_one_layer_forward.3} parent=5 // pred_fallthru
        _
      %p206 = scmp.le.s32.totalorder 1, %s16
      %p207 = scmp.lt.s32.totalorder %s16, 3
      %p208 = pnand %p206, %p207
      %p209 = pneg %p208
      // Predicated region
      $region29: #{rnn_one_layer_forward.3} parent=5 // pred_check
        _
      $region30: #{rnn_one_layer_forward.3} parent=5 // pred_check_branch
        %211 = sbr.rel (%p208) target = $region32
      $region31: #{rnn_one_layer_forward.3} parent=5 // pred_region
        %s212 = ssub.s32 %s16, 1
        // Predicated region
        $region33: #{rnn_one_layer_forward.3} parent=31 // pred_check
          %p213 = pneg %p54
        $region34: #{rnn_one_layer_forward.3} parent=31 // pred_check_branch
          %215 = sbr.rel (%p213) target = $region36
        $region35: #{rnn_one_layer_forward.3} parent=31 // pred_region
          %216 = dma.done [#allocation3], 512
        $region36: #{rnn_one_layer_forward.3} parent=31 // pred_fallthru
          _
        %s217 = sand.u32 %s21, 1
        %s218 = scalar_lea.sflag [#allocation6], %s217
        %s219 = sand.u32 %s67, 1
        %s220 = smul.addr %s219, 32
        %s221 = scalar_lea.vmem [#allocation5], %s220
        // Predicated region
        $region37: #{rnn_one_layer_forward.3} parent=31 // pred_check
          %p222 = pneg %p80
        $region38: #{rnn_one_layer_forward.3} parent=31 // pred_check_branch
          %224 = sbr.rel (%p222) target = $region40
        $region39: #{rnn_one_layer_forward.3} parent=31 // pred_region
          %225 = dma.done %s218, 512
        $region40: #{rnn_one_layer_forward.3} parent=31 // pred_fallthru
          _
        %s226 = sand.u32 %s21, 1
        %s227 = scalar_lea.sflag [#allocation6], %s226
        %s228 = sand.u32 %s93, 1
        %s229 = scalar_lea.vmem [#allocation7], %s228
        // Predicated region
        $region41: #{rnn_one_layer_forward.3} parent=31 // pred_check
          %p230 = pneg %p106
        $region42: #{rnn_one_layer_forward.3} parent=31 // pred_check_branch
          %232 = sbr.rel (%p230) target = $region44
        $region43: #{rnn_one_layer_forward.3} parent=31 // pred_region
          %233 = dma.done %s227, 16
        $region44: #{rnn_one_layer_forward.3} parent=31 // pred_fallthru
          _
        %p234 = pneg %p54
        %p235 = pneg %p51
        %s236 = sand.u32 %s21, 1
        %s237 = scalar_lea.sflag [#allocation6], %s236
        %s238 = sand.u32 %s67, 1
        %s239 = smul.addr %s238, 32
        %s240 = scalar_lea.vmem [#allocation5], %s239
        %p241 = pneg %p80
        %p242 = pneg %p77
        %s243 = sand.u32 %s21, 1
        %s244 = scalar_lea.sflag [#allocation6], %s243
        %s245 = sand.u32 %s93, 1
        %s246 = scalar_lea.vmem [#allocation7], %s245
        %p247 = pneg %p106
        %p248 = pneg %p103
        %p249 = pneg %p134
        %p250 = pneg %p131
        %s251 = sand.u32 %s121, 1
        %s252 = scalar_lea.sflag [#allocation4], %s251
        %s253 = sand.u32 %s121, 1
        %s254 = smul.addr %s253, 32
        %s255 = scalar_lea.vmem [#allocation8], %s254
        %s256 = smul.u32 4, %s25
        %s257 = smul.u32 4, %s25
        %v258 = vld [vmem:[#allocation2] sm:$0xff]
        %v259 = vld [vmem:[#allocation2 + $0x8] sm:$0xff]
        %v260 = vld [vmem:[#allocation2 + $0x10] sm:$0xff]
        %v261 = vld [vmem:[#allocation2 + $0x18] sm:$0xff]
        %v262 = vld [vmem:[%s221] sm:$0xff]
        %v263 = vld [vmem:[%s221 + $0x8] sm:$0xff]
        %v264 = vld [vmem:[%s221 + $0x10] sm:$0xff]
        %v265 = vld [vmem:[%s221 + $0x18] sm:$0xff]
        %v266 = vld [vmem:[%s229] sm:$0x1]
        %v268 = vlaneseq
        %v269 = vshrl.u32 %v268, 7
        %v270 = vsub.s32 0, %v269
        %v271 = vrot.slane %v266, %v270
        %vm273 = vcmask 261120
        %v275 = vsel %vm273, %v258, 0
        %v278 = vsel %vm273, %v259, 0
        %v281 = vsel %vm273, %v260, 0
        %v284 = vsel %vm273, %v261, 0
        %286 = vmatprep.subr.mxu0 0.0
        %287 = vmatpush1.msra.mxu0 %v262
        %288 = vmatprep.subr.mxu0 0.0
        %289 = vmatpush1.msra.mxu0 %v263
        %290 = vmatprep.subr.mxu0 0.0
        %291 = vmatpush1.msra.mxu0 %v264
        %292 = vmatprep.subr.mxu0 0.0
        %293 = vmatpush1.msra.mxu0 %v265
        %294 = vmatprep.subr.mxu0 0.0
        %295 = vmatpush1.msra.mxu0 0.0
        %296 = vmatprep.subr.mxu0 0.0
        %297 = vmatpush1.msra.mxu0 0.0
        %298 = vmatprep.subr.mxu0 0.0
        %299 = vmatpush1.msra.mxu0 0.0
        %300 = vmatprep.subr.mxu0 0.0
        %301 = vmatpush1.msra.mxu0 0.0
        %302 = vmatprep.subr.mxu0 0.0
        %303 = vmatpush1.msra.mxu0 0.0
        %304 = vmatprep.subr.mxu0 0.0
        %305 = vmatpush1.msra.mxu0 0.0
        %306 = vmatprep.subr.mxu0 0.0
        %307 = vmatpush1.msra.mxu0 0.0
        %308 = vmatprep.subr.mxu0 0.0
        %309 = vmatpush1.msra.mxu0 0.0
        %310 = vmatprep.subr.mxu0 0.0
        %311 = vmatpush1.msra.mxu0 0.0
        %312 = vmatprep.subr.mxu0 0.0
        %313 = vmatpush1.msra.mxu0 0.0
        %314 = vmatprep.subr.mxu0 0.0
        %315 = vmatpush1.msra.mxu0 0.0
        %316 = vmatprep.subr.mxu0 0.0
        %317 = vmatpush1.msra.mxu0 0.0
        %318 = vmatprep.subr.mxu0 0.0
        %319 = vmatpush1.msra.mxu0 0.0
        %320 = vmatprep.subr.mxu0 0.0
        %321 = vmatpush1.msra.mxu0 0.0
        %322 = vmatprep.subr.mxu0 0.0
        %323 = vmatpush1.msra.mxu0 0.0
        %324 = vmatprep.subr.mxu0 0.0
        %325 = vmatpush1.msra.mxu0 0.0
        %326 = vmatprep.subr.mxu0 0.0
        %327 = vmatpush1.msra.mxu0 0.0
        %328 = vmatprep.subr.mxu0 0.0
        %329 = vmatpush1.msra.mxu0 0.0
        %330 = vmatprep.subr.mxu0 0.0
        %331 = vmatpush1.msra.mxu0 0.0
        %332 = vmatprep.subr.mxu0 0.0
        %333 = vmatpush1.msra.mxu0 0.0
        %334 = vmatprep.subr.mxu0 0.0
        %335 = vmatpush1.msra.mxu0 0.0
        %336 = vmatprep.subr.mxu0 0.0
        %337 = vmatpush1.msra.mxu0 0.0
        %338 = vmatprep.subr.mxu0 0.0
        %339 = vmatpush1.msra.mxu0 0.0
        %340 = vmatprep.subr.mxu0 0.0
        %341 = vmatpush1.msra.mxu0 0.0
        %342 = vmatprep.subr.mxu0 0.0
        %343 = vmatpush1.msra.mxu0 0.0
        %344 = vmatprep.subr.mxu0 0.0
        %345 = vmatpush1.msra.mxu0 0.0
        %346 = vmatprep.subr.mxu0 0.0
        %347 = vmatpush1.msra.mxu0 0.0
        %348 = vmatprep.subr.mxu0 0.0
        %349 = vmatpush1.msra.mxu0 0.0
        %350 = vmatprep.mubr.f32.mxu0 0.0
        %351 = vmatmul.mubr.f32.gmra.mrb[0].mxu0 %v275
        %v352 = vpop.f32.mrb[0].mxu0
        %v353 = vadd.f32 %v271, %v352
        %v354 = vpop.f32.mrb[0].mxu0
        %355 = vmatprep.mubr.f32.mxu0 0.0
        %356 = vmatmul.mubr.f32.gmra.mrb[0].mxu0 %v278
        %v357 = vpop.f32.mrb[0].mxu0
        %v358 = vadd.f32 %v271, %v357
        %v359 = vpop.f32.mrb[0].mxu0
        %360 = vmatprep.mubr.f32.mxu0 0.0
        %361 = vmatmul.mubr.f32.gmra.mrb[0].mxu0 %v281
        %v362 = vpop.f32.mrb[0].mxu0
        %v363 = vadd.f32 %v271, %v362
        %v364 = vpop.f32.mrb[0].mxu0
        %365 = vmatprep.mubr.f32.mxu0 0.0
        %366 = vmatmul.mubr.f32.gmra.mrb[0].mxu0 %v284
        %v367 = vpop.f32.mrb[0].mxu0
        %v368 = vadd.f32 %v271, %v367
        %v369 = vpop.f32.mrb[0].mxu0
        %370 = vdwg.mxu0
        %371 = vst [vmem:[%s255] sm:$0xff] %v353
        %372 = vst [vmem:[%s255 + $0x8] sm:$0xff] %v358
        %373 = vst [vmem:[%s255 + $0x10] sm:$0xff] %v363
        %374 = vst [vmem:[%s255 + $0x18] sm:$0xff] %v368
        %s375 = sand.u32 %s121, 1
        %s376 = scalar_lea.sflag [#allocation4], %s375
        %s377 = sand.u32 %s121, 1
        %s378 = smul.addr %s377, 32
        %s379 = scalar_lea.vmem [#allocation8], %s378
        // Predicated region
        $region45: #{rnn_one_layer_forward.3} parent=31 // pred_check
          %p380 = pneg %p131
        $region46: #{rnn_one_layer_forward.3} parent=31 // pred_check_branch
          %382 = sbr.rel (%p380) target = $region48
        $region47: #{rnn_one_layer_forward.3} parent=31 // pred_region
          %s383 = smul.u32 4, %s25
          %s385 = ssub.s32 512, 512
          %386 = vsyncadd %s376, %s385
          %s387 = smul.addr %s383, 2
          %s388 = sadd.s32 %s26, %s387
          %s389 = smul.addr %s388, 128
          %s390 = scalar_lea.hbm %s3, %s389
          %s391 = sshll.u32 %s379, 4
          %s392 = int_to_ptr.vmem [resolvable:$true] %s391
          %397 = dma.vmem_to_hbm [thread:$0]  %s392, 512, %s390, %s376, 128, 256, 8
        $region48: #{rnn_one_layer_forward.3} parent=31 // pred_fallthru
          _
      $region32: #{rnn_one_layer_forward.3} parent=5 // pred_fallthru
        _
      %p398 = scmp.le.s32.totalorder 2, %s16
      // Predicated region
      $region49: #{rnn_one_layer_forward.3} parent=5 // pred_check
        %p399 = pneg %p398
      $region50: #{rnn_one_layer_forward.3} parent=5 // pred_check_branch
        %401 = sbr.rel (%p399) target = $region52
      $region51: #{rnn_one_layer_forward.3} parent=5 // pred_region
        %s402 = ssub.s32 %s16, 2
        // Predicated region
        $region53: #{rnn_one_layer_forward.3} parent=51 // pred_check
          %p403 = pneg %p137
        $region54: #{rnn_one_layer_forward.3} parent=51 // pred_check_branch
          %405 = sbr.rel (%p403) target = $region56
        $region55: #{rnn_one_layer_forward.3} parent=51 // pred_region
          %s406 = sand.u32 %s122, 1
          %s407 = scalar_lea.sflag [#allocation4], %s406
          %s408 = sand.u32 %s122, 1
          %s409 = smul.addr %s408, 32
          %s410 = scalar_lea.vmem [#allocation8], %s409
          %411 = dma.done %s407, 512
        $region56: #{rnn_one_layer_forward.3} parent=51 // pred_fallthru
          _
      $region52: #{rnn_one_layer_forward.3} parent=5 // pred_fallthru
        _
    $region6: #{rnn_one_layer_forward.3} parent=1 // loop_footer
      %s20 = sadd.s32 1, %s16
    $region7: #{rnn_one_layer_forward.3} parent=1 // loop_footer_branch
      %15 = sbr.rel target = $region3
    $region8: #{rnn_one_layer_forward.3} parent=1 // loop_exit
      _
    %412 = vsyncpa [#allocation3], 1
    %s413 = scalar_lea.sflag [#allocation3], 1
    %414 = vsyncpa %s413, 1
    %415 = vsyncpa [#allocation6], 1
    %s416 = scalar_lea.sflag [#allocation6], 1
    %417 = vsyncpa %s416, 1
    %418 = vsyncpa [#allocation4], 1
    %s419 = scalar_lea.sflag [#allocation4], 1
    %420 = vsyncpa %s419, 1

// kernel: rnn_one_layer_forward.2
$region0: #{rnn_one_layer_forward.2}
  #allocation0 [shape = 'u32[]', space=smem, size = 0x4, offset = 0x4, fixed_abs, tag = 'smem constant byte address 0x4 - core index']
  #allocation1 [shape = 'u32[144,128]{1,0:T(1,128)}', space=vmem, size = 0x12000, scoped, tag = 'internal scratch']
  #allocation2 [shape = 'f32[2,32]{1,0:T(2,128)}', space=vmem, size = 0x400, scoped, tag = 'scratch operand']
  %s0 = inlined_call_operand.hbm [shape: f32[16,2,32], index: 0, kind: input, shape index: {}]
  %s1 = inlined_call_operand.hbm [shape: f32[2,32], index: 1, kind: input, shape index: {}]
  %s2 = inlined_call_operand.hbm [shape: f32[32,32], index: 2, kind: input, shape index: {}]
  %s3 = inlined_call_operand.hbm [shape: f32[2,16,32], index: 3, kind: output, shape index: {0}]
  %s4 = inlined_call_operand.hbm [shape: f32[2,32], index: 4, kind: output, shape index: {1}]
  %5 = xla_tuple %s3, %s4
  %s6 = sld [smem:[#allocation0]]
  $region73: #{rnn_one_layer_forward.2} parent=0
    _
  %s8 = ssub.s32 1, %s6
  %s9 = scalar_select 0, %s8, %s6
  $region1: #{rnn_one_layer_forward.2} parent=0
    #allocation3 [shape = 'u8[16384]{0}', space=vmem, size = 0x4000, scoped, tag = 'input window, operand 0']
    #allocation4 [shape = 's32[2]{0}', space=sflag, size = 0x8, scoped, tag = 'scoped memory for rnn_one_layer_forward.2']
    #allocation5 [shape = 's32[2]{0}', space=sflag, size = 0x8, scoped, tag = 'scoped memory for rnn_one_layer_forward.2']
    #allocation6 [shape = 'u8[1024]{0}', space=vmem, size = 0x400, scoped, tag = 'input window, operand 1, single buffered']
    #allocation7 [shape = 's32[1]{0}', space=sflag, size = 0x4, scoped, tag = 'scoped memory for rnn_one_layer_forward.2']
    #allocation8 [shape = 'u8[16384]{0}', space=vmem, size = 0x4000, scoped, tag = 'input window, operand 2, single buffered']
    #allocation9 [shape = 'u8[16384]{0}', space=vmem, size = 0x4000, scoped, tag = 'output window, operand 0']
    #allocation10 [shape = 'u8[1024]{0}', space=vmem, size = 0x400, scoped, tag = 'output window, operand 1, single buffered']
    #allocation11 [shape = 's32[1]{0}', space=sflag, size = 0x4, scoped, tag = 'scoped memory for rnn_one_layer_forward.2']
    %10 = vsyncpa [#allocation4], 0
    %s11 = scalar_lea.sflag [#allocation4], 1
    %12 = vsyncpa %s11, 0
    %13 = vsyncpa [#allocation7], 0
    %14 = vsyncpa [#allocation5], 0
    %s15 = scalar_lea.sflag [#allocation5], 1
    %16 = vsyncpa %s15, 0
    %17 = vsyncpa [#allocation11], 0
    loop: start=0, step=1, limit=4
    $region2: #{rnn_one_layer_forward.2} parent=1 // loop_pre_header
      _
    $region3: #{rnn_one_layer_forward.2} parent=1 // loop_header
      %s19 = sphi 0, %s23
      %p20 = scmp.ge.s32.totalorder %s19, 4
      %s29 = sphi 0, %s31
      %s32 = sphi 0, %s29
      %s33 = sphi 0, %s32
      %s49 = sphi 0, %s33
      %s53 = sphi 0, %s53
      %s55 = sphi 0, %s53
      %s56 = sphi 0, %s55
      %s70 = sphi 0, %s56
      %s74 = sphi 0, %s74
      %s76 = sphi 0, %s74
      %s77 = sphi 0, %s76
      %s91 = sphi 0, %s77
      %s97 = sphi 0, %s99
      %s100 = sphi 0, %s97
      %s101 = sphi 0, %s100
      %s117 = sphi 0, %s101
      %s121 = sphi 0, %s121
      %s123 = sphi 0, %s121
      %s124 = sphi 0, %s123
      %s138 = sphi 0, %s124
    $region4: #{rnn_one_layer_forward.2} parent=1 // loop_header_branch
      %22 = sbr.rel (%p20) target = $region8
    $region5: #{rnn_one_layer_forward.2} parent=1 // loop_body
      %s24 = ssub.s32 %s19, 1
      %s25 = ssub.s32 %s19, 2
      %s26 = sadd.s32 %s19, 1
      %s27 = ssub.s32 %s19, %s26
      %p28 = scmp.eq.s32.totalorder %s27, 0
      %s30 = sadd.s32 %s29, 1
      %s31 = scalar_select %p28, %s29, %s30
      %p34 = pneg %p28
      %p35 = scmp.eq.s32.totalorder %s19, 1
      %p36 = por %p34, %p35
      %p37 = scmp.ne.s32.totalorder %s29, %s32
      %p38 = scmp.eq.s32.totalorder %s19, 0
      %p39 = por %p37, %p38
      %p40 = scmp.ne.s32.totalorder %s29, %s32
      %p41 = scmp.eq.s32.totalorder %s24, 1
      %p42 = por %p40, %p41
      %p43 = scmp.ne.s32.totalorder %s32, %s33
      %p44 = scmp.eq.s32.totalorder %s24, 0
      %p45 = por %p43, %p44
      %p46 = scmp.ne.s32.totalorder %s32, %s33
      %p47 = scmp.eq.s32.totalorder %s25, 1
      %p48 = por %p46, %p47
      %p50 = scmp.ne.s32.totalorder %s33, %s49
      %p51 = scmp.eq.s32.totalorder %s25, 0
      %p52 = por %p50, %p51
      %s54 = sadd.s32 %s53, 1
      %p57 = scmp.eq.s32.totalorder %s19, 1
      %p58 = scmp.ne.s32.totalorder %s53, %s55
      %p59 = scmp.eq.s32.totalorder %s19, 0
      %p60 = por %p58, %p59
      %p61 = scmp.ne.s32.totalorder %s53, %s55
      %p62 = scmp.eq.s32.totalorder %s24, 1
      %p63 = por %p61, %p62
      %p64 = scmp.ne.s32.totalorder %s55, %s56
      %p65 = scmp.eq.s32.totalorder %s24, 0
      %p66 = por %p64, %p65
      %p67 = scmp.ne.s32.totalorder %s55, %s56
      %p68 = scmp.eq.s32.totalorder %s25, 1
      %p69 = por %p67, %p68
      %p71 = scmp.ne.s32.totalorder %s56, %s70
      %p72 = scmp.eq.s32.totalorder %s25, 0
      %p73 = por %p71, %p72
      %s75 = sadd.s32 %s74, 1
      %p78 = scmp.eq.s32.totalorder %s19, 1
      %p79 = scmp.ne.s32.totalorder %s74, %s76
      %p80 = scmp.eq.s32.totalorder %s19, 0
      %p81 = por %p79, %p80
      %p82 = scmp.ne.s32.totalorder %s74, %s76
      %p83 = scmp.eq.s32.totalorder %s24, 1
      %p84 = por %p82, %p83
      %p85 = scmp.ne.s32.totalorder %s76, %s77
      %p86 = scmp.eq.s32.totalorder %s24, 0
      %p87 = por %p85, %p86
      %p88 = scmp.ne.s32.totalorder %s76, %s77
      %p89 = scmp.eq.s32.totalorder %s25, 1
      %p90 = por %p88, %p89
      %p92 = scmp.ne.s32.totalorder %s77, %s91
      %p93 = scmp.eq.s32.totalorder %s25, 0
      %p94 = por %p92, %p93
      %s95 = ssub.s32 %s19, %s26
      %p96 = scmp.eq.s32.totalorder %s95, 0
      %s98 = sadd.s32 %s97, 1
      %s99 = scalar_select %p96, %s97, %s98
      %p102 = pneg %p96
      %p103 = scmp.eq.s32.totalorder %s19, 1
      %p104 = por %p102, %p103
      %p105 = scmp.ne.s32.totalorder %s97, %s100
      %p106 = scmp.eq.s32.totalorder %s19, 0
      %p107 = por %p105, %p106
      %p108 = scmp.ne.s32.totalorder %s97, %s100
      %p109 = scmp.eq.s32.totalorder %s24, 1
      %p110 = por %p108, %p109
      %p111 = scmp.ne.s32.totalorder %s100, %s101
      %p112 = scmp.eq.s32.totalorder %s24, 0
      %p113 = por %p111, %p112
      %p114 = scmp.ne.s32.totalorder %s100, %s101
      %p115 = scmp.eq.s32.totalorder %s25, 1
      %p116 = por %p114, %p115
      %p118 = scmp.ne.s32.totalorder %s101, %s117
      %p119 = scmp.eq.s32.totalorder %s25, 0
      %p120 = por %p118, %p119
      %s122 = sadd.s32 %s121, 1
      %p125 = scmp.eq.s32.totalorder %s19, 1
      %p126 = scmp.ne.s32.totalorder %s121, %s123
      %p127 = scmp.eq.s32.totalorder %s19, 0
      %p128 = por %p126, %p127
      %p129 = scmp.ne.s32.totalorder %s121, %s123
      %p130 = scmp.eq.s32.totalorder %s24, 1
      %p131 = por %p129, %p130
      %p132 = scmp.ne.s32.totalorder %s123, %s124
      %p133 = scmp.eq.s32.totalorder %s24, 0
      %p134 = por %p132, %p133
      %p135 = scmp.ne.s32.totalorder %s123, %s124
      %p136 = scmp.eq.s32.totalorder %s25, 1
      %p137 = por %p135, %p136
      %p139 = scmp.ne.s32.totalorder %s124, %s138
      %p140 = scmp.eq.s32.totalorder %s25, 0
      %p141 = por %p139, %p140
      %p142 = scmp.le.s32.totalorder 1, %s19
      %p143 = scmp.lt.s32.totalorder %s19, 3
      %p144 = pnand %p142, %p143
      %p145 = pneg %p144
      // Predicated region
      $region9: #{rnn_one_layer_forward.2} parent=5 // pred_check
        _
      $region10: #{rnn_one_layer_forward.2} parent=5 // pred_check_branch
        %147 = sbr.rel (%p144) target = $region12
      $region11: #{rnn_one_layer_forward.2} parent=5 // pred_region
        %s148 = ssub.s32 %s19, 1
        // Predicated region
        $region13: #{rnn_one_layer_forward.2} parent=11 // pred_check
          %p149 = pneg %p66
        $region14: #{rnn_one_layer_forward.2} parent=11 // pred_check_branch
          %151 = sbr.rel (%p149) target = $region16
        $region15: #{rnn_one_layer_forward.2} parent=11 // pred_region
          %s153 = ssub.s32 32, 32
          %154 = vsyncadd [#allocation7], %s153
          %s156 = sshll.u32 [#allocation6], 4
          %s157 = int_to_ptr.vmem [resolvable:$true] %s156
          %159 = dma.hbm_to_vmem [thread:$0]  %s1, 32, %s157, [#allocation7]
        $region16: #{rnn_one_layer_forward.2} parent=11 // pred_fallthru
          _
        // Predicated region
        $region17: #{rnn_one_layer_forward.2} parent=11 // pred_check
          %p160 = pneg %p87
        $region18: #{rnn_one_layer_forward.2} parent=11 // pred_check_branch
          %162 = sbr.rel (%p160) target = $region20
        $region19: #{rnn_one_layer_forward.2} parent=11 // pred_region
          %s164 = ssub.s32 512, 512
          %165 = vsyncadd [#allocation7], %s164
          %s166 = sshll.u32 [#allocation8], 4
          %s167 = int_to_ptr.vmem [resolvable:$true] %s166
          %172 = dma.hbm_to_vmem [thread:$0]  %s2, 512, %s167, [#allocation7], 128, 128, 8
        $region20: #{rnn_one_layer_forward.2} parent=11 // pred_fallthru
          _
      $region12: #{rnn_one_layer_forward.2} parent=5 // pred_fallthru
        _
      %p173 = scmp.lt.s32.totalorder %s19, 2
      // Predicated region
      $region21: #{rnn_one_layer_forward.2} parent=5 // pred_check
        %p174 = pneg %p173
      $region22: #{rnn_one_layer_forward.2} parent=5 // pred_check_branch
        %176 = sbr.rel (%p174) target = $region24
      $region23: #{rnn_one_layer_forward.2} parent=5 // pred_region
        // Predicated region
        $region25: #{rnn_one_layer_forward.2} parent=23 // pred_check
          %p177 = pneg %p39
        $region26: #{rnn_one_layer_forward.2} parent=23 // pred_check_branch
          %179 = sbr.rel (%p177) target = $region28
        $region27: #{rnn_one_layer_forward.2} parent=23 // pred_region
          %s180 = sand.u32 %s29, 1
          %s181 = scalar_lea.sflag [#allocation4], %s180
          %s182 = sand.u32 %s29, 1
          %s183 = smul.addr %s182, 16
          %s184 = scalar_lea.vmem [#allocation3], %s183
          %s185 = smul.u32 8, %s19
          %s187 = ssub.s32 256, 256
          %188 = vsyncadd %s181, %s187
          %s189 = smul.addr %s185, 32
          %s190 = scalar_lea.hbm %s0, %s189
          %s191 = sshll.u32 %s184, 4
          %s192 = int_to_ptr.vmem [resolvable:$true] %s191
          %197 = dma.hbm_to_vmem [thread:$0]  %s190, 256, %s192, %s181, 32, 32, 2
        $region28: #{rnn_one_layer_forward.2} parent=23 // pred_fallthru
          _
      $region24: #{rnn_one_layer_forward.2} parent=5 // pred_fallthru
        _
      %p198 = scmp.le.s32.totalorder 1, %s19
      %p199 = scmp.lt.s32.totalorder %s19, 3
      %p200 = pnand %p198, %p199
      %p201 = pneg %p200
      // Predicated region
      $region29: #{rnn_one_layer_forward.2} parent=5 // pred_check
        _
      $region30: #{rnn_one_layer_forward.2} parent=5 // pred_check_branch
        %203 = sbr.rel (%p200) target = $region32
      $region31: #{rnn_one_layer_forward.2} parent=5 // pred_region
        %s204 = ssub.s32 %s19, 1
        %s205 = sand.u32 %s32, 1
        %s206 = scalar_lea.sflag [#allocation4], %s205
        %s207 = sand.u32 %s32, 1
        %s208 = smul.addr %s207, 16
        %s209 = scalar_lea.vmem [#allocation3], %s208
        // Predicated region
        $region33: #{rnn_one_layer_forward.2} parent=31 // pred_check
          %p210 = pneg %p45
        $region34: #{rnn_one_layer_forward.2} parent=31 // pred_check_branch
          %212 = sbr.rel (%p210) target = $region36
        $region35: #{rnn_one_layer_forward.2} parent=31 // pred_region
          %213 = dma.done %s206, 256
        $region36: #{rnn_one_layer_forward.2} parent=31 // pred_fallthru
          _
        // Predicated region
        $region37: #{rnn_one_layer_forward.2} parent=31 // pred_check
          %p214 = pneg %p66
        $region38: #{rnn_one_layer_forward.2} parent=31 // pred_check_branch
          %216 = sbr.rel (%p214) target = $region40
        $region39: #{rnn_one_layer_forward.2} parent=31 // pred_region
          %217 = dma.done [#allocation7], 32
        $region40: #{rnn_one_layer_forward.2} parent=31 // pred_fallthru
          _
        // Predicated region
        $region41: #{rnn_one_layer_forward.2} parent=31 // pred_check
          %p218 = pneg %p87
        $region42: #{rnn_one_layer_forward.2} parent=31 // pred_check_branch
          %220 = sbr.rel (%p218) target = $region44
        $region43: #{rnn_one_layer_forward.2} parent=31 // pred_region
          %221 = dma.done [#allocation7], 512
        $region44: #{rnn_one_layer_forward.2} parent=31 // pred_fallthru
          _
        %s222 = sand.u32 %s32, 1
        %s223 = scalar_lea.sflag [#allocation4], %s222
        %s224 = sand.u32 %s32, 1
        %s225 = smul.addr %s224, 16
        %s226 = scalar_lea.vmem [#allocation3], %s225
        %p227 = pneg %p45
        %p228 = pneg %p42
        %p229 = pneg %p66
        %p230 = pneg %p63
        %p231 = pneg %p87
        %p232 = pneg %p84
        %p233 = pneg %p113
        %p234 = pneg %p110
        %s235 = sand.u32 %s100, 1
        %s236 = scalar_lea.sflag [#allocation5], %s235
        %s237 = sand.u32 %s100, 1
        %s238 = smul.addr %s237, 16
        %s239 = scalar_lea.vmem [#allocation9], %s238
        %p240 = pneg %p134
        %p241 = pneg %p131
        %s242 = smul.u32 8, %s24
        %p243 = scmp.eq.s32.totalorder %s24, 0
        // Predicated region
        $region45: #{rnn_one_layer_forward.2} parent=31 // pred_check
          %p244 = pneg %p243
        $region46: #{rnn_one_layer_forward.2} parent=31 // pred_check_branch
          %246 = sbr.rel (%p244) target = $region48
        $region47: #{rnn_one_layer_forward.2} parent=31 // pred_region
          %v247 = vld [vmem:[#allocation6] sm:$0x3]
          %vm248 = vcmask 254976
          %249 = vst.msk [vmem:[#allocation2] sm:$0x3] %vm248, %v247
        $region48: #{rnn_one_layer_forward.2} parent=31 // pred_fallthru
          _
        %v250 = vld [vmem:[#allocation8] sm:$0xff]
        %v251 = vld [vmem:[#allocation8 + $0x8] sm:$0xff]
        %v252 = vld [vmem:[#allocation8 + $0x10] sm:$0xff]
        %v253 = vld [vmem:[#allocation8 + $0x18] sm:$0xff]
        %v254 = vld [vmem:[#allocation2] sm:$0x3]
        %v255 = vld [vmem:[%s209] sm:$0x3]
        %vm256 = vcmask 261120
        %v258 = vsel %vm256, %v254, 0
        %260 = vmatprep.subr.mxu0 0.0
        %261 = vmatpush1.msra.mxu0 %v250
        %262 = vmatprep.subr.mxu0 0.0
        %263 = vmatpush1.msra.mxu0 %v251
        %264 = vmatprep.subr.mxu0 0.0
        %265 = vmatpush1.msra.mxu0 %v252
        %266 = vmatprep.subr.mxu0 0.0
        %267 = vmatpush1.msra.mxu0 %v253
        %268 = vmatprep.subr.mxu0 0.0
        %269 = vmatpush1.msra.mxu0 0.0
        %270 = vmatprep.subr.mxu0 0.0
        %271 = vmatpush1.msra.mxu0 0.0
        %272 = vmatprep.subr.mxu0 0.0
        %273 = vmatpush1.msra.mxu0 0.0
        %274 = vmatprep.subr.mxu0 0.0
        %275 = vmatpush1.msra.mxu0 0.0
        %276 = vmatprep.subr.mxu0 0.0
        %277 = vmatpush1.msra.mxu0 0.0
        %278 = vmatprep.subr.mxu0 0.0
        %279 = vmatpush1.msra.mxu0 0.0
        %280 = vmatprep.subr.mxu0 0.0
        %281 = vmatpush1.msra.mxu0 0.0
        %282 = vmatprep.subr.mxu0 0.0
        %283 = vmatpush1.msra.mxu0 0.0
        %284 = vmatprep.subr.mxu0 0.0
        %285 = vmatpush1.msra.mxu0 0.0
        %286 = vmatprep.subr.mxu0 0.0
        %287 = vmatpush1.msra.mxu0 0.0
        %288 = vmatprep.subr.mxu0 0.0
        %289 = vmatpush1.msra.mxu0 0.0
        %290 = vmatprep.subr.mxu0 0.0
        %291 = vmatpush1.msra.mxu0 0.0
        %292 = vmatprep.subr.mxu0 0.0
        %293 = vmatpush1.msra.mxu0 0.0
        %294 = vmatprep.subr.mxu0 0.0
        %295 = vmatpush1.msra.mxu0 0.0
        %296 = vmatprep.subr.mxu0 0.0
        %297 = vmatpush1.msra.mxu0 0.0
        %298 = vmatprep.subr.mxu0 0.0
        %299 = vmatpush1.msra.mxu0 0.0
        %300 = vmatprep.subr.mxu0 0.0
        %301 = vmatpush1.msra.mxu0 0.0
        %302 = vmatprep.subr.mxu0 0.0
        %303 = vmatpush1.msra.mxu0 0.0
        %304 = vmatprep.subr.mxu0 0.0
        %305 = vmatpush1.msra.mxu0 0.0
        %306 = vmatprep.subr.mxu0 0.0
        %307 = vmatpush1.msra.mxu0 0.0
        %308 = vmatprep.subr.mxu0 0.0
        %309 = vmatpush1.msra.mxu0 0.0
        %310 = vmatprep.subr.mxu0 0.0
        %311 = vmatpush1.msra.mxu0 0.0
        %312 = vmatprep.subr.mxu0 0.0
        %313 = vmatpush1.msra.mxu0 0.0
        %314 = vmatprep.subr.mxu0 0.0
        %315 = vmatpush1.msra.mxu0 0.0
        %316 = vmatprep.subr.mxu0 0.0
        %317 = vmatpush1.msra.mxu0 0.0
        %318 = vmatprep.subr.mxu0 0.0
        %319 = vmatpush1.msra.mxu0 0.0
        %320 = vmatprep.subr.mxu0 0.0
        %321 = vmatpush1.msra.mxu0 0.0
        %322 = vmatprep.subr.mxu0 0.0
        %323 = vmatpush1.msra.mxu0 0.0
        %324 = vmatprep.mubr.f32.mxu0 0.0
        %325 = vmatmul.mubr.f32.gmra.mrb[0].mxu0 %v258
        %v326 = vpop.f32.mrb[0].mxu0
        %v327 = vadd.f32 0.0, %v326
        %v328 = vpop.f32.mrb[0].mxu0
        %329 = vdwg.mxu0
        %v330 = vadd.f32 %v255, %v327
        %v331 = vtanh.pop %v330
        %vm332 = vcmask 254976
        %333 = vst.msk [vmem:[#allocation2] sm:$0x3] %vm332, %v331
        %v336 = vunpack.c.l.s4 1966171168
        %v337 = vunpack.c.0.s8 %v336
        %v338 = vlaneseq
        %v339 = vshrl.u32 %v338, 7
        %v340 = vsub.s32 %v337, %v339
        %v341 = vrot.slane %v331, %v340
        %v342 = vcombine.high %v341, %v341
        %v344 = vunpack.c.l.s4 1966171168
        %v345 = vunpack.c.0.s8 %v344
        %v346 = vlaneseq
        %v347 = vshrl.u32 %v346, 7
        %v348 = vsub.s32 %v345, %v347
        %v349 = vrot.slane %v341, %v348
        %v351 = vunpack.c.l.s4 1966171168
        %v352 = vunpack.c.0.s8 %v351
        %v353 = vlaneseq
        %v354 = vshrl.u32 %v353, 7
        %v355 = vsub.s32 %v352, %v354
        %v356 = vrot.slane %v342, %v355
        %vm359 = vcmask 253952
        %360 = vst.msk [vmem:[%s239] sm:$0x1] %vm359, %v349
        %361 = vst.msk [vmem:[%s239 + $0x8] sm:$0x1] %vm359, %v356
        %v362 = vld [vmem:[#allocation2] sm:$0x3]
        %s363 = scalar_lea.vmem %s209, 2 [#allocation3]
        %v364 = vld [vmem:[%s363] sm:$0x3]
        %v366 = vsel %vm256, %v362, 0
        %368 = vmatprep.subr.mxu0 0.0
        %369 = vmatpush1.msra.mxu0 %v250
        %370 = vmatprep.subr.mxu0 0.0
        %371 = vmatpush1.msra.mxu0 %v251
        %372 = vmatprep.subr.mxu0 0.0
        %373 = vmatpush1.msra.mxu0 %v252
        %374 = vmatprep.subr.mxu0 0.0
        %375 = vmatpush1.msra.mxu0 %v253
        %376 = vmatprep.subr.mxu0 0.0
        %377 = vmatpush1.msra.mxu0 0.0
        %378 = vmatprep.subr.mxu0 0.0
        %379 = vmatpush1.msra.mxu0 0.0
        %380 = vmatprep.subr.mxu0 0.0
        %381 = vmatpush1.msra.mxu0 0.0
        %382 = vmatprep.subr.mxu0 0.0
        %383 = vmatpush1.msra.mxu0 0.0
        %384 = vmatprep.subr.mxu0 0.0
        %385 = vmatpush1.msra.mxu0 0.0
        %386 = vmatprep.subr.mxu0 0.0
        %387 = vmatpush1.msra.mxu0 0.0
        %388 = vmatprep.subr.mxu0 0.0
        %389 = vmatpush1.msra.mxu0 0.0
        %390 = vmatprep.subr.mxu0 0.0
        %391 = vmatpush1.msra.mxu0 0.0
        %392 = vmatprep.subr.mxu0 0.0
        %393 = vmatpush1.msra.mxu0 0.0
        %394 = vmatprep.subr.mxu0 0.0
        %395 = vmatpush1.msra.mxu0 0.0
        %396 = vmatprep.subr.mxu0 0.0
        %397 = vmatpush1.msra.mxu0 0.0
        %398 = vmatprep.subr.mxu0 0.0
        %399 = vmatpush1.msra.mxu0 0.0
        %400 = vmatprep.subr.mxu0 0.0
        %401 = vmatpush1.msra.mxu0 0.0
        %402 = vmatprep.subr.mxu0 0.0
        %403 = vmatpush1.msra.mxu0 0.0
        %404 = vmatprep.subr.mxu0 0.0
        %405 = vmatpush1.msra.mxu0 0.0
        %406 = vmatprep.subr.mxu0 0.0
        %407 = vmatpush1.msra.mxu0 0.0
        %408 = vmatprep.subr.mxu0 0.0
        %409 = vmatpush1.msra.mxu0 0.0
        %410 = vmatprep.subr.mxu0 0.0
        %411 = vmatpush1.msra.mxu0 0.0
        %412 = vmatprep.subr.mxu0 0.0
        %413 = vmatpush1.msra.mxu0 0.0
        %414 = vmatprep.subr.mxu0 0.0
        %415 = vmatpush1.msra.mxu0 0.0
        %416 = vmatprep.subr.mxu0 0.0
        %417 = vmatpush1.msra.mxu0 0.0
        %418 = vmatprep.subr.mxu0 0.0
        %419 = vmatpush1.msra.mxu0 0.0
        %420 = vmatprep.subr.mxu0 0.0
        %421 = vmatpush1.msra.mxu0 0.0
        %422 = vmatprep.subr.mxu0 0.0
        %423 = vmatpush1.msra.mxu0 0.0
        %424 = vmatprep.subr.mxu0 0.0
        %425 = vmatpush1.msra.mxu0 0.0
        %426 = vmatprep.subr.mxu0 0.0
        %427 = vmatpush1.msra.mxu0 0.0
        %428 = vmatprep.subr.mxu0 0.0
        %429 = vmatpush1.msra.mxu0 0.0
        %430 = vmatprep.subr.mxu0 0.0
        %431 = vmatpush1.msra.mxu0 0.0
        %432 = vmatprep.mubr.f32.mxu0 0.0
        %433 = vmatmul.mubr.f32.gmra.mrb[0].mxu0 %v366
        %v434 = vpop.f32.mrb[0].mxu0
        %v435 = vadd.f32 0.0, %v434
        %v436 = vpop.f32.mrb[0].mxu0
        %437 = vdwg.mxu0
        %v438 = vadd.f32 %v364, %v435
        %v439 = vtanh.pop %v438
        %440 = vst.msk [vmem:[#allocation2] sm:$0x3] %vm332, %v439
        %v443 = vunpack.c.l.s4 1966171168
        %v444 = vunpack.c.0.s8 %v443
        %v445 = vlaneseq
        %v446 = vshrl.u32 %v445, 7
        %v447 = vsub.s32 %v444, %v446
        %v448 = vrot.slane %v439, %v447
        %v449 = vcombine.high %v448, %v448
        %v451 = vunpack.c.l.s4 1966171168
        %v452 = vunpack.c.0.s8 %v451
        %v453 = vlaneseq
        %v454 = vshrl.u32 %v453, 7
        %v455 = vsub.s32 %v452, %v454
        %v456 = vrot.slane %v448, %v455
        %v458 = vunpack.c.l.s4 1966171168
        %v459 = vunpack.c.0.s8 %v458
        %v460 = vlaneseq
        %v461 = vshrl.u32 %v460, 7
        %v462 = vsub.s32 %v459, %v461
        %v463 = vrot.slane %v449, %v462
        %466 = vst.msk [vmem:[%s239 + $0x1] sm:$0x1] %vm359, %v456
        %467 = vst.msk [vmem:[%s239 + $0x9] sm:$0x1] %vm359, %v463
        %v468 = vld [vmem:[#allocation2] sm:$0x3]
        %s469 = scalar_lea.vmem %s209, 4 [#allocation3]
        %v470 = vld [vmem:[%s469] sm:$0x3]
        %v472 = vsel %vm256, %v468, 0
        %474 = vmatprep.subr.mxu0 0.0
        %475 = vmatpush1.msra.mxu0 %v250
        %476 = vmatprep.subr.mxu0 0.0
        %477 = vmatpush1.msra.mxu0 %v251
        %478 = vmatprep.subr.mxu0 0.0
        %479 = vmatpush1.msra.mxu0 %v252
        %480 = vmatprep.subr.mxu0 0.0
        %481 = vmatpush1.msra.mxu0 %v253
        %482 = vmatprep.subr.mxu0 0.0
        %483 = vmatpush1.msra.mxu0 0.0
        %484 = vmatprep.subr.mxu0 0.0
        %485 = vmatpush1.msra.mxu0 0.0
        %486 = vmatprep.subr.mxu0 0.0
        %487 = vmatpush1.msra.mxu0 0.0
        %488 = vmatprep.subr.mxu0 0.0
        %489 = vmatpush1.msra.mxu0 0.0
        %490 = vmatprep.subr.mxu0 0.0
        %491 = vmatpush1.msra.mxu0 0.0
        %492 = vmatprep.subr.mxu0 0.0
        %493 = vmatpush1.msra.mxu0 0.0
        %494 = vmatprep.subr.mxu0 0.0
        %495 = vmatpush1.msra.mxu0 0.0
        %496 = vmatprep.subr.mxu0 0.0
        %497 = vmatpush1.msra.mxu0 0.0
        %498 = vmatprep.subr.mxu0 0.0
        %499 = vmatpush1.msra.mxu0 0.0
        %500 = vmatprep.subr.mxu0 0.0
        %501 = vmatpush1.msra.mxu0 0.0
        %502 = vmatprep.subr.mxu0 0.0
        %503 = vmatpush1.msra.mxu0 0.0
        %504 = vmatprep.subr.mxu0 0.0
        %505 = vmatpush1.msra.mxu0 0.0
        %506 = vmatprep.subr.mxu0 0.0
        %507 = vmatpush1.msra.mxu0 0.0
        %508 = vmatprep.subr.mxu0 0.0
        %509 = vmatpush1.msra.mxu0 0.0
        %510 = vmatprep.subr.mxu0 0.0
        %511 = vmatpush1.msra.mxu0 0.0
        %512 = vmatprep.subr.mxu0 0.0
        %513 = vmatpush1.msra.mxu0 0.0
        %514 = vmatprep.subr.mxu0 0.0
        %515 = vmatpush1.msra.mxu0 0.0
        %516 = vmatprep.subr.mxu0 0.0
        %517 = vmatpush1.msra.mxu0 0.0
        %518 = vmatprep.subr.mxu0 0.0
        %519 = vmatpush1.msra.mxu0 0.0
        %520 = vmatprep.subr.mxu0 0.0
        %521 = vmatpush1.msra.mxu0 0.0
        %522 = vmatprep.subr.mxu0 0.0
        %523 = vmatpush1.msra.mxu0 0.0
        %524 = vmatprep.subr.mxu0 0.0
        %525 = vmatpush1.msra.mxu0 0.0
        %526 = vmatprep.subr.mxu0 0.0
        %527 = vmatpush1.msra.mxu0 0.0
        %528 = vmatprep.subr.mxu0 0.0
        %529 = vmatpush1.msra.mxu0 0.0
        %530 = vmatprep.subr.mxu0 0.0
        %531 = vmatpush1.msra.mxu0 0.0
        %532 = vmatprep.subr.mxu0 0.0
        %533 = vmatpush1.msra.mxu0 0.0
        %534 = vmatprep.subr.mxu0 0.0
        %535 = vmatpush1.msra.mxu0 0.0
        %536 = vmatprep.subr.mxu0 0.0
        %537 = vmatpush1.msra.mxu0 0.0
        %538 = vmatprep.mubr.f32.mxu0 0.0
        %539 = vmatmul.mubr.f32.gmra.mrb[0].mxu0 %v472
        %v540 = vpop.f32.mrb[0].mxu0
        %v541 = vadd.f32 0.0, %v540
        %v542 = vpop.f32.mrb[0].mxu0
        %543 = vdwg.mxu0
        %v544 = vadd.f32 %v470, %v541
        %v545 = vtanh.pop %v544
        %546 = vst.msk [vmem:[#allocation2] sm:$0x3] %vm332, %v545
        %v549 = vunpack.c.l.s4 1966171168
        %v550 = vunpack.c.0.s8 %v549
        %v551 = vlaneseq
        %v552 = vshrl.u32 %v551, 7
        %v553 = vsub.s32 %v550, %v552
        %v554 = vrot.slane %v545, %v553
        %v555 = vcombine.high %v554, %v554
        %v557 = vunpack.c.l.s4 1966171168
        %v558 = vunpack.c.0.s8 %v557
        %v559 = vlaneseq
        %v560 = vshrl.u32 %v559, 7
        %v561 = vsub.s32 %v558, %v560
        %v562 = vrot.slane %v554, %v561
        %v564 = vunpack.c.l.s4 1966171168
        %v565 = vunpack.c.0.s8 %v564
        %v566 = vlaneseq
        %v567 = vshrl.u32 %v566, 7
        %v568 = vsub.s32 %v565, %v567
        %v569 = vrot.slane %v555, %v568
        %572 = vst.msk [vmem:[%s239 + $0x2] sm:$0x1] %vm359, %v562
        %573 = vst.msk [vmem:[%s239 + $0xa] sm:$0x1] %vm359, %v569
        %v574 = vld [vmem:[#allocation2] sm:$0x3]
        %s575 = scalar_lea.vmem %s209, 6 [#allocation3]
        %v576 = vld [vmem:[%s575] sm:$0x3]
        %v578 = vsel %vm256, %v574, 0
        %580 = vmatprep.subr.mxu0 0.0
        %581 = vmatpush1.msra.mxu0 %v250
        %582 = vmatprep.subr.mxu0 0.0
        %583 = vmatpush1.msra.mxu0 %v251
        %584 = vmatprep.subr.mxu0 0.0
        %585 = vmatpush1.msra.mxu0 %v252
        %586 = vmatprep.subr.mxu0 0.0
        %587 = vmatpush1.msra.mxu0 %v253
        %588 = vmatprep.subr.mxu0 0.0
        %589 = vmatpush1.msra.mxu0 0.0
        %590 = vmatprep.subr.mxu0 0.0
        %591 = vmatpush1.msra.mxu0 0.0
        %592 = vmatprep.subr.mxu0 0.0
        %593 = vmatpush1.msra.mxu0 0.0
        %594 = vmatprep.subr.mxu0 0.0
        %595 = vmatpush1.msra.mxu0 0.0
        %596 = vmatprep.subr.mxu0 0.0
        %597 = vmatpush1.msra.mxu0 0.0
        %598 = vmatprep.subr.mxu0 0.0
        %599 = vmatpush1.msra.mxu0 0.0
        %600 = vmatprep.subr.mxu0 0.0
        %601 = vmatpush1.msra.mxu0 0.0
        %602 = vmatprep.subr.mxu0 0.0
        %603 = vmatpush1.msra.mxu0 0.0
        %604 = vmatprep.subr.mxu0 0.0
        %605 = vmatpush1.msra.mxu0 0.0
        %606 = vmatprep.subr.mxu0 0.0
        %607 = vmatpush1.msra.mxu0 0.0
        %608 = vmatprep.subr.mxu0 0.0
        %609 = vmatpush1.msra.mxu0 0.0
        %610 = vmatprep.subr.mxu0 0.0
        %611 = vmatpush1.msra.mxu0 0.0
        %612 = vmatprep.subr.mxu0 0.0
        %613 = vmatpush1.msra.mxu0 0.0
        %614 = vmatprep.subr.mxu0 0.0
        %615 = vmatpush1.msra.mxu0 0.0
        %616 = vmatprep.subr.mxu0 0.0
        %617 = vmatpush1.msra.mxu0 0.0
        %618 = vmatprep.subr.mxu0 0.0
        %619 = vmatpush1.msra.mxu0 0.0
        %620 = vmatprep.subr.mxu0 0.0
        %621 = vmatpush1.msra.mxu0 0.0
        %622 = vmatprep.subr.mxu0 0.0
        %623 = vmatpush1.msra.mxu0 0.0
        %624 = vmatprep.subr.mxu0 0.0
        %625 = vmatpush1.msra.mxu0 0.0
        %626 = vmatprep.subr.mxu0 0.0
        %627 = vmatpush1.msra.mxu0 0.0
        %628 = vmatprep.subr.mxu0 0.0
        %629 = vmatpush1.msra.mxu0 0.0
        %630 = vmatprep.subr.mxu0 0.0
        %631 = vmatpush1.msra.mxu0 0.0
        %632 = vmatprep.subr.mxu0 0.0
        %633 = vmatpush1.msra.mxu0 0.0
        %634 = vmatprep.subr.mxu0 0.0
        %635 = vmatpush1.msra.mxu0 0.0
        %636 = vmatprep.subr.mxu0 0.0
        %637 = vmatpush1.msra.mxu0 0.0
        %638 = vmatprep.subr.mxu0 0.0
        %639 = vmatpush1.msra.mxu0 0.0
        %640 = vmatprep.subr.mxu0 0.0
        %641 = vmatpush1.msra.mxu0 0.0
        %642 = vmatprep.subr.mxu0 0.0
        %643 = vmatpush1.msra.mxu0 0.0
        %644 = vmatprep.mubr.f32.mxu0 0.0
        %645 = vmatmul.mubr.f32.gmra.mrb[0].mxu0 %v578
        %v646 = vpop.f32.mrb[0].mxu0
        %v647 = vadd.f32 0.0, %v646
        %v648 = vpop.f32.mrb[0].mxu0
        %649 = vdwg.mxu0
        %v650 = vadd.f32 %v576, %v647
        %v651 = vtanh.pop %v650
        %652 = vst.msk [vmem:[#allocation2] sm:$0x3] %vm332, %v651
        %v655 = vunpack.c.l.s4 1966171168
        %v656 = vunpack.c.0.s8 %v655
        %v657 = vlaneseq
        %v658 = vshrl.u32 %v657, 7
        %v659 = vsub.s32 %v656, %v658
        %v660 = vrot.slane %v651, %v659
        %v661 = vcombine.high %v660, %v660
        %v663 = vunpack.c.l.s4 1966171168
        %v664 = vunpack.c.0.s8 %v663
        %v665 = vlaneseq
        %v666 = vshrl.u32 %v665, 7
        %v667 = vsub.s32 %v664, %v666
        %v668 = vrot.slane %v660, %v667
        %v670 = vunpack.c.l.s4 1966171168
        %v671 = vunpack.c.0.s8 %v670
        %v672 = vlaneseq
        %v673 = vshrl.u32 %v672, 7
        %v674 = vsub.s32 %v671, %v673
        %v675 = vrot.slane %v661, %v674
        %678 = vst.msk [vmem:[%s239 + $0x3] sm:$0x1] %vm359, %v668
        %679 = vst.msk [vmem:[%s239 + $0xb] sm:$0x1] %vm359, %v675
        %v680 = vld [vmem:[#allocation2] sm:$0x3]
        %s681 = scalar_lea.vmem %s209, 8 [#allocation3]
        %v682 = vld [vmem:[%s681] sm:$0x3]
        %v684 = vsel %vm256, %v680, 0
        %686 = vmatprep.subr.mxu0 0.0
        %687 = vmatpush1.msra.mxu0 %v250
        %688 = vmatprep.subr.mxu0 0.0
        %689 = vmatpush1.msra.mxu0 %v251
        %690 = vmatprep.subr.mxu0 0.0
        %691 = vmatpush1.msra.mxu0 %v252
        %692 = vmatprep.subr.mxu0 0.0
        %693 = vmatpush1.msra.mxu0 %v253
        %694 = vmatprep.subr.mxu0 0.0
        %695 = vmatpush1.msra.mxu0 0.0
        %696 = vmatprep.subr.mxu0 0.0
        %697 = vmatpush1.msra.mxu0 0.0
        %698 = vmatprep.subr.mxu0 0.0
        %699 = vmatpush1.msra.mxu0 0.0
        %700 = vmatprep.subr.mxu0 0.0
        %701 = vmatpush1.msra.mxu0 0.0
        %702 = vmatprep.subr.mxu0 0.0
        %703 = vmatpush1.msra.mxu0 0.0
        %704 = vmatprep.subr.mxu0 0.0
        %705 = vmatpush1.msra.mxu0 0.0
        %706 = vmatprep.subr.mxu0 0.0
        %707 = vmatpush1.msra.mxu0 0.0
        %708 = vmatprep.subr.mxu0 0.0
        %709 = vmatpush1.msra.mxu0 0.0
        %710 = vmatprep.subr.mxu0 0.0
        %711 = vmatpush1.msra.mxu0 0.0
        %712 = vmatprep.subr.mxu0 0.0
        %713 = vmatpush1.msra.mxu0 0.0
        %714 = vmatprep.subr.mxu0 0.0
        %715 = vmatpush1.msra.mxu0 0.0
        %716 = vmatprep.subr.mxu0 0.0
        %717 = vmatpush1.msra.mxu0 0.0
        %718 = vmatprep.subr.mxu0 0.0
        %719 = vmatpush1.msra.mxu0 0.0
        %720 = vmatprep.subr.mxu0 0.0
        %721 = vmatpush1.msra.mxu0 0.0
        %722 = vmatprep.subr.mxu0 0.0
        %723 = vmatpush1.msra.mxu0 0.0
        %724 = vmatprep.subr.mxu0 0.0
        %725 = vmatpush1.msra.mxu0 0.0
        %726 = vmatprep.subr.mxu0 0.0
        %727 = vmatpush1.msra.mxu0 0.0
        %728 = vmatprep.subr.mxu0 0.0
        %729 = vmatpush1.msra.mxu0 0.0
        %730 = vmatprep.subr.mxu0 0.0
        %731 = vmatpush1.msra.mxu0 0.0
        %732 = vmatprep.subr.mxu0 0.0
        %733 = vmatpush1.msra.mxu0 0.0
        %734 = vmatprep.subr.mxu0 0.0
        %735 = vmatpush1.msra.mxu0 0.0
        %736 = vmatprep.subr.mxu0 0.0
        %737 = vmatpush1.msra.mxu0 0.0
        %738 = vmatprep.subr.mxu0 0.0
        %739 = vmatpush1.msra.mxu0 0.0
        %740 = vmatprep.subr.mxu0 0.0
        %741 = vmatpush1.msra.mxu0 0.0
        %742 = vmatprep.subr.mxu0 0.0
        %743 = vmatpush1.msra.mxu0 0.0
        %744 = vmatprep.subr.mxu0 0.0
        %745 = vmatpush1.msra.mxu0 0.0
        %746 = vmatprep.subr.mxu0 0.0
        %747 = vmatpush1.msra.mxu0 0.0
        %748 = vmatprep.subr.mxu0 0.0
        %749 = vmatpush1.msra.mxu0 0.0
        %750 = vmatprep.mubr.f32.mxu0 0.0
        %751 = vmatmul.mubr.f32.gmra.mrb[0].mxu0 %v684
        %v752 = vpop.f32.mrb[0].mxu0
        %v753 = vadd.f32 0.0, %v752
        %v754 = vpop.f32.mrb[0].mxu0
        %755 = vdwg.mxu0
        %v756 = vadd.f32 %v682, %v753
        %v757 = vtanh.pop %v756
        %758 = vst.msk [vmem:[#allocation2] sm:$0x3] %vm332, %v757
        %v761 = vunpack.c.l.s4 1966171168
        %v762 = vunpack.c.0.s8 %v761
        %v763 = vlaneseq
        %v764 = vshrl.u32 %v763, 7
        %v765 = vsub.s32 %v762, %v764
        %v766 = vrot.slane %v757, %v765
        %v767 = vcombine.high %v766, %v766
        %v769 = vunpack.c.l.s4 1966171168
        %v770 = vunpack.c.0.s8 %v769
        %v771 = vlaneseq
        %v772 = vshrl.u32 %v771, 7
        %v773 = vsub.s32 %v770, %v772
        %v774 = vrot.slane %v766, %v773
        %v776 = vunpack.c.l.s4 1966171168
        %v777 = vunpack.c.0.s8 %v776
        %v778 = vlaneseq
        %v779 = vshrl.u32 %v778, 7
        %v780 = vsub.s32 %v777, %v779
        %v781 = vrot.slane %v767, %v780
        %784 = vst.msk [vmem:[%s239 + $0x4] sm:$0x1] %vm359, %v774
        %785 = vst.msk [vmem:[%s239 + $0xc] sm:$0x1] %vm359, %v781
        %v786 = vld [vmem:[#allocation2] sm:$0x3]
        %s787 = scalar_lea.vmem %s209, 10 [#allocation3]
        %v788 = vld [vmem:[%s787] sm:$0x3]
        %v790 = vsel %vm256, %v786, 0
        %792 = vmatprep.subr.mxu0 0.0
        %793 = vmatpush1.msra.mxu0 %v250
        %794 = vmatprep.subr.mxu0 0.0
        %795 = vmatpush1.msra.mxu0 %v251
        %796 = vmatprep.subr.mxu0 0.0
        %797 = vmatpush1.msra.mxu0 %v252
        %798 = vmatprep.subr.mxu0 0.0
        %799 = vmatpush1.msra.mxu0 %v253
        %800 = vmatprep.subr.mxu0 0.0
        %801 = vmatpush1.msra.mxu0 0.0
        %802 = vmatprep.subr.mxu0 0.0
        %803 = vmatpush1.msra.mxu0 0.0
        %804 = vmatprep.subr.mxu0 0.0
        %805 = vmatpush1.msra.mxu0 0.0
        %806 = vmatprep.subr.mxu0 0.0
        %807 = vmatpush1.msra.mxu0 0.0
        %808 = vmatprep.subr.mxu0 0.0
        %809 = vmatpush1.msra.mxu0 0.0
        %810 = vmatprep.subr.mxu0 0.0
        %811 = vmatpush1.msra.mxu0 0.0
        %812 = vmatprep.subr.mxu0 0.0
        %813 = vmatpush1.msra.mxu0 0.0
        %814 = vmatprep.subr.mxu0 0.0
        %815 = vmatpush1.msra.mxu0 0.0
        %816 = vmatprep.subr.mxu0 0.0
        %817 = vmatpush1.msra.mxu0 0.0
        %818 = vmatprep.subr.mxu0 0.0
        %819 = vmatpush1.msra.mxu0 0.0
        %820 = vmatprep.subr.mxu0 0.0
        %821 = vmatpush1.msra.mxu0 0.0
        %822 = vmatprep.subr.mxu0 0.0
        %823 = vmatpush1.msra.mxu0 0.0
        %824 = vmatprep.subr.mxu0 0.0
        %825 = vmatpush1.msra.mxu0 0.0
        %826 = vmatprep.subr.mxu0 0.0
        %827 = vmatpush1.msra.mxu0 0.0
        %828 = vmatprep.subr.mxu0 0.0
        %829 = vmatpush1.msra.mxu0 0.0
        %830 = vmatprep.subr.mxu0 0.0
        %831 = vmatpush1.msra.mxu0 0.0
        %832 = vmatprep.subr.mxu0 0.0
        %833 = vmatpush1.msra.mxu0 0.0
        %834 = vmatprep.subr.mxu0 0.0
        %835 = vmatpush1.msra.mxu0 0.0
        %836 = vmatprep.subr.mxu0 0.0
        %837 = vmatpush1.msra.mxu0 0.0
        %838 = vmatprep.subr.mxu0 0.0
        %839 = vmatpush1.msra.mxu0 0.0
        %840 = vmatprep.subr.mxu0 0.0
        %841 = vmatpush1.msra.mxu0 0.0
        %842 = vmatprep.subr.mxu0 0.0
        %843 = vmatpush1.msra.mxu0 0.0
        %844 = vmatprep.subr.mxu0 0.0
        %845 = vmatpush1.msra.mxu0 0.0
        %846 = vmatprep.subr.mxu0 0.0
        %847 = vmatpush1.msra.mxu0 0.0
        %848 = vmatprep.subr.mxu0 0.0
        %849 = vmatpush1.msra.mxu0 0.0
        %850 = vmatprep.subr.mxu0 0.0
        %851 = vmatpush1.msra.mxu0 0.0
        %852 = vmatprep.subr.mxu0 0.0
        %853 = vmatpush1.msra.mxu0 0.0
        %854 = vmatprep.subr.mxu0 0.0
        %855 = vmatpush1.msra.mxu0 0.0
        %856 = vmatprep.mubr.f32.mxu0 0.0
        %857 = vmatmul.mubr.f32.gmra.mrb[0].mxu0 %v790
        %v858 = vpop.f32.mrb[0].mxu0
        %v859 = vadd.f32 0.0, %v858
        %v860 = vpop.f32.mrb[0].mxu0
        %861 = vdwg.mxu0
        %v862 = vadd.f32 %v788, %v859
        %v863 = vtanh.pop %v862
        %864 = vst.msk [vmem:[#allocation2] sm:$0x3] %vm332, %v863
        %v867 = vunpack.c.l.s4 1966171168
        %v868 = vunpack.c.0.s8 %v867
        %v869 = vlaneseq
        %v870 = vshrl.u32 %v869, 7
        %v871 = vsub.s32 %v868, %v870
        %v872 = vrot.slane %v863, %v871
        %v873 = vcombine.high %v872, %v872
        %v875 = vunpack.c.l.s4 1966171168
        %v876 = vunpack.c.0.s8 %v875
        %v877 = vlaneseq
        %v878 = vshrl.u32 %v877, 7
        %v879 = vsub.s32 %v876, %v878
        %v880 = vrot.slane %v872, %v879
        %v882 = vunpack.c.l.s4 1966171168
        %v883 = vunpack.c.0.s8 %v882
        %v884 = vlaneseq
        %v885 = vshrl.u32 %v884, 7
        %v886 = vsub.s32 %v883, %v885
        %v887 = vrot.slane %v873, %v886
        %890 = vst.msk [vmem:[%s239 + $0x5] sm:$0x1] %vm359, %v880
        %891 = vst.msk [vmem:[%s239 + $0xd] sm:$0x1] %vm359, %v887
        %v892 = vld [vmem:[#allocation2] sm:$0x3]
        %s893 = scalar_lea.vmem %s209, 12 [#allocation3]
        %v894 = vld [vmem:[%s893] sm:$0x3]
        %v896 = vsel %vm256, %v892, 0
        %898 = vmatprep.subr.mxu0 0.0
        %899 = vmatpush1.msra.mxu0 %v250
        %900 = vmatprep.subr.mxu0 0.0
        %901 = vmatpush1.msra.mxu0 %v251
        %902 = vmatprep.subr.mxu0 0.0
        %903 = vmatpush1.msra.mxu0 %v252
        %904 = vmatprep.subr.mxu0 0.0
        %905 = vmatpush1.msra.mxu0 %v253
        %906 = vmatprep.subr.mxu0 0.0
        %907 = vmatpush1.msra.mxu0 0.0
        %908 = vmatprep.subr.mxu0 0.0
        %909 = vmatpush1.msra.mxu0 0.0
        %910 = vmatprep.subr.mxu0 0.0
        %911 = vmatpush1.msra.mxu0 0.0
        %912 = vmatprep.subr.mxu0 0.0
        %913 = vmatpush1.msra.mxu0 0.0
        %914 = vmatprep.subr.mxu0 0.0
        %915 = vmatpush1.msra.mxu0 0.0
        %916 = vmatprep.subr.mxu0 0.0
        %917 = vmatpush1.msra.mxu0 0.0
        %918 = vmatprep.subr.mxu0 0.0
        %919 = vmatpush1.msra.mxu0 0.0
        %920 = vmatprep.subr.mxu0 0.0
        %921 = vmatpush1.msra.mxu0 0.0
        %922 = vmatprep.subr.mxu0 0.0
        %923 = vmatpush1.msra.mxu0 0.0
        %924 = vmatprep.subr.mxu0 0.0
        %925 = vmatpush1.msra.mxu0 0.0
        %926 = vmatprep.subr.mxu0 0.0
        %927 = vmatpush1.msra.mxu0 0.0
        %928 = vmatprep.subr.mxu0 0.0
        %929 = vmatpush1.msra.mxu0 0.0
        %930 = vmatprep.subr.mxu0 0.0
        %931 = vmatpush1.msra.mxu0 0.0
        %932 = vmatprep.subr.mxu0 0.0
        %933 = vmatpush1.msra.mxu0 0.0
        %934 = vmatprep.subr.mxu0 0.0
        %935 = vmatpush1.msra.mxu0 0.0
        %936 = vmatprep.subr.mxu0 0.0
        %937 = vmatpush1.msra.mxu0 0.0
        %938 = vmatprep.subr.mxu0 0.0
        %939 = vmatpush1.msra.mxu0 0.0
        %940 = vmatprep.subr.mxu0 0.0
        %941 = vmatpush1.msra.mxu0 0.0
        %942 = vmatprep.subr.mxu0 0.0
        %943 = vmatpush1.msra.mxu0 0.0
        %944 = vmatprep.subr.mxu0 0.0
        %945 = vmatpush1.msra.mxu0 0.0
        %946 = vmatprep.subr.mxu0 0.0
        %947 = vmatpush1.msra.mxu0 0.0
        %948 = vmatprep.subr.mxu0 0.0
        %949 = vmatpush1.msra.mxu0 0.0
        %950 = vmatprep.subr.mxu0 0.0
        %951 = vmatpush1.msra.mxu0 0.0
        %952 = vmatprep.subr.mxu0 0.0
        %953 = vmatpush1.msra.mxu0 0.0
        %954 = vmatprep.subr.mxu0 0.0
        %955 = vmatpush1.msra.mxu0 0.0
        %956 = vmatprep.subr.mxu0 0.0
        %957 = vmatpush1.msra.mxu0 0.0
        %958 = vmatprep.subr.mxu0 0.0
        %959 = vmatpush1.msra.mxu0 0.0
        %960 = vmatprep.subr.mxu0 0.0
        %961 = vmatpush1.msra.mxu0 0.0
        %962 = vmatprep.mubr.f32.mxu0 0.0
        %963 = vmatmul.mubr.f32.gmra.mrb[0].mxu0 %v896
        %v964 = vpop.f32.mrb[0].mxu0
        %v965 = vadd.f32 0.0, %v964
        %v966 = vpop.f32.mrb[0].mxu0
        %967 = vdwg.mxu0
        %v968 = vadd.f32 %v894, %v965
        %v969 = vtanh.pop %v968
        %970 = vst.msk [vmem:[#allocation2] sm:$0x3] %vm332, %v969
        %v973 = vunpack.c.l.s4 1966171168
        %v974 = vunpack.c.0.s8 %v973
        %v975 = vlaneseq
        %v976 = vshrl.u32 %v975, 7
        %v977 = vsub.s32 %v974, %v976
        %v978 = vrot.slane %v969, %v977
        %v979 = vcombine.high %v978, %v978
        %v981 = vunpack.c.l.s4 1966171168
        %v982 = vunpack.c.0.s8 %v981
        %v983 = vlaneseq
        %v984 = vshrl.u32 %v983, 7
        %v985 = vsub.s32 %v982, %v984
        %v986 = vrot.slane %v978, %v985
        %v988 = vunpack.c.l.s4 1966171168
        %v989 = vunpack.c.0.s8 %v988
        %v990 = vlaneseq
        %v991 = vshrl.u32 %v990, 7
        %v992 = vsub.s32 %v989, %v991
        %v993 = vrot.slane %v979, %v992
        %996 = vst.msk [vmem:[%s239 + $0x6] sm:$0x1] %vm359, %v986
        %997 = vst.msk [vmem:[%s239 + $0xe] sm:$0x1] %vm359, %v993
        %v998 = vld [vmem:[#allocation2] sm:$0x3]
        %s999 = scalar_lea.vmem %s209, 14 [#allocation3]
        %v1000 = vld [vmem:[%s999] sm:$0x3]
        %v1002 = vsel %vm256, %v998, 0
        %1004 = vmatprep.subr.mxu0 0.0
        %1005 = vmatpush1.msra.mxu0 %v250
        %1006 = vmatprep.subr.mxu0 0.0
        %1007 = vmatpush1.msra.mxu0 %v251
        %1008 = vmatprep.subr.mxu0 0.0
        %1009 = vmatpush1.msra.mxu0 %v252
        %1010 = vmatprep.subr.mxu0 0.0
        %1011 = vmatpush1.msra.mxu0 %v253
        %1012 = vmatprep.subr.mxu0 0.0
        %1013 = vmatpush1.msra.mxu0 0.0
        %1014 = vmatprep.subr.mxu0 0.0
        %1015 = vmatpush1.msra.mxu0 0.0
        %1016 = vmatprep.subr.mxu0 0.0
        %1017 = vmatpush1.msra.mxu0 0.0
        %1018 = vmatprep.subr.mxu0 0.0
        %1019 = vmatpush1.msra.mxu0 0.0
        %1020 = vmatprep.subr.mxu0 0.0
        %1021 = vmatpush1.msra.mxu0 0.0
        %1022 = vmatprep.subr.mxu0 0.0
        %1023 = vmatpush1.msra.mxu0 0.0
        %1024 = vmatprep.subr.mxu0 0.0
        %1025 = vmatpush1.msra.mxu0 0.0
        %1026 = vmatprep.subr.mxu0 0.0
        %1027 = vmatpush1.msra.mxu0 0.0
        %1028 = vmatprep.subr.mxu0 0.0
        %1029 = vmatpush1.msra.mxu0 0.0
        %1030 = vmatprep.subr.mxu0 0.0
        %1031 = vmatpush1.msra.mxu0 0.0
        %1032 = vmatprep.subr.mxu0 0.0
        %1033 = vmatpush1.msra.mxu0 0.0
        %1034 = vmatprep.subr.mxu0 0.0
        %1035 = vmatpush1.msra.mxu0 0.0
        %1036 = vmatprep.subr.mxu0 0.0
        %1037 = vmatpush1.msra.mxu0 0.0
        %1038 = vmatprep.subr.mxu0 0.0
        %1039 = vmatpush1.msra.mxu0 0.0
        %1040 = vmatprep.subr.mxu0 0.0
        %1041 = vmatpush1.msra.mxu0 0.0
        %1042 = vmatprep.subr.mxu0 0.0
        %1043 = vmatpush1.msra.mxu0 0.0
        %1044 = vmatprep.subr.mxu0 0.0
        %1045 = vmatpush1.msra.mxu0 0.0
        %1046 = vmatprep.subr.mxu0 0.0
        %1047 = vmatpush1.msra.mxu0 0.0
        %1048 = vmatprep.subr.mxu0 0.0
        %1049 = vmatpush1.msra.mxu0 0.0
        %1050 = vmatprep.subr.mxu0 0.0
        %1051 = vmatpush1.msra.mxu0 0.0
        %1052 = vmatprep.subr.mxu0 0.0
        %1053 = vmatpush1.msra.mxu0 0.0
        %1054 = vmatprep.subr.mxu0 0.0
        %1055 = vmatpush1.msra.mxu0 0.0
        %1056 = vmatprep.subr.mxu0 0.0
        %1057 = vmatpush1.msra.mxu0 0.0
        %1058 = vmatprep.subr.mxu0 0.0
        %1059 = vmatpush1.msra.mxu0 0.0
        %1060 = vmatprep.subr.mxu0 0.0
        %1061 = vmatpush1.msra.mxu0 0.0
        %1062 = vmatprep.subr.mxu0 0.0
        %1063 = vmatpush1.msra.mxu0 0.0
        %1064 = vmatprep.subr.mxu0 0.0
        %1065 = vmatpush1.msra.mxu0 0.0
        %1066 = vmatprep.subr.mxu0 0.0
        %1067 = vmatpush1.msra.mxu0 0.0
        %1068 = vmatprep.mubr.f32.mxu0 0.0
        %1069 = vmatmul.mubr.f32.gmra.mrb[0].mxu0 %v1002
        %v1070 = vpop.f32.mrb[0].mxu0
        %v1071 = vadd.f32 0.0, %v1070
        %v1072 = vpop.f32.mrb[0].mxu0
        %1073 = vdwg.mxu0
        %v1074 = vadd.f32 %v1000, %v1071
        %v1075 = vtanh.pop %v1074
        %1076 = vst.msk [vmem:[#allocation2] sm:$0x3] %vm332, %v1075
        %v1079 = vunpack.c.l.s4 1966171168
        %v1080 = vunpack.c.0.s8 %v1079
        %v1081 = vlaneseq
        %v1082 = vshrl.u32 %v1081, 7
        %v1083 = vsub.s32 %v1080, %v1082
        %v1084 = vrot.slane %v1075, %v1083
        %v1085 = vcombine.high %v1084, %v1084
        %v1087 = vunpack.c.l.s4 1966171168
        %v1088 = vunpack.c.0.s8 %v1087
        %v1089 = vlaneseq
        %v1090 = vshrl.u32 %v1089, 7
        %v1091 = vsub.s32 %v1088, %v1090
        %v1092 = vrot.slane %v1084, %v1091
        %v1094 = vunpack.c.l.s4 1966171168
        %v1095 = vunpack.c.0.s8 %v1094
        %v1096 = vlaneseq
        %v1097 = vshrl.u32 %v1096, 7
        %v1098 = vsub.s32 %v1095, %v1097
        %v1099 = vrot.slane %v1085, %v1098
        %1102 = vst.msk [vmem:[%s239 + $0x7] sm:$0x1] %vm359, %v1092
        %1103 = vst.msk [vmem:[%s239 + $0xf] sm:$0x1] %vm359, %v1099
        %p1104 = scmp.eq.s32.totalorder %s24, 1
        // Predicated region
        $region49: #{rnn_one_layer_forward.2} parent=31 // pred_check
          %p1105 = pneg %p1104
        $region50: #{rnn_one_layer_forward.2} parent=31 // pred_check_branch
          %1107 = sbr.rel (%p1105) target = $region52
        $region51: #{rnn_one_layer_forward.2} parent=31 // pred_region
          %v1108 = vld [vmem:[#allocation2] sm:$0x3]
          %1109 = vst.msk [vmem:[#allocation10] sm:$0x3] %vm332, %v1108
        $region52: #{rnn_one_layer_forward.2} parent=31 // pred_fallthru
          _
        %s1110 = sand.u32 %s100, 1
        %s1111 = scalar_lea.sflag [#allocation5], %s1110
        %s1112 = sand.u32 %s100, 1
        %s1113 = smul.addr %s1112, 16
        %s1114 = scalar_lea.vmem [#allocation9], %s1113
        // Predicated region
        $region53: #{rnn_one_layer_forward.2} parent=31 // pred_check
          %p1115 = pneg %p110
        $region54: #{rnn_one_layer_forward.2} parent=31 // pred_check_branch
          %1117 = sbr.rel (%p1115) target = $region56
        $region55: #{rnn_one_layer_forward.2} parent=31 // pred_region
          %s1119 = ssub.s32 256, 256
          %1120 = vsyncadd %s1111, %s1119
          %s1121 = smul.addr %s24, 128
          %s1122 = scalar_lea.hbm %s3, %s1121
          %s1123 = sshll.u32 %s1114, 4
          %s1124 = int_to_ptr.vmem [resolvable:$true] %s1123
          %1129 = dma.vmem_to_hbm [thread:$0]  %s1124, 256, %s1122, %s1111, 128, 256, 8
        $region56: #{rnn_one_layer_forward.2} parent=31 // pred_fallthru
          _
        // Predicated region
        $region57: #{rnn_one_layer_forward.2} parent=31 // pred_check
          %p1130 = pneg %p131
        $region58: #{rnn_one_layer_forward.2} parent=31 // pred_check_branch
          %1132 = sbr.rel (%p1130) target = $region60
        $region59: #{rnn_one_layer_forward.2} parent=31 // pred_region
          %s1134 = ssub.s32 32, 32
          %1135 = vsyncadd [#allocation11], %s1134
          %s1137 = sshll.u32 [#allocation10], 4
          %s1138 = int_to_ptr.vmem [resolvable:$true] %s1137
          %1140 = dma.vmem_to_hbm [thread:$0]  %s1138, 32, %s4, [#allocation11]
        $region60: #{rnn_one_layer_forward.2} parent=31 // pred_fallthru
          _
        // Predicated region
        $region61: #{rnn_one_layer_forward.2} parent=31 // pred_check
          %p1141 = pneg %p131
        $region62: #{rnn_one_layer_forward.2} parent=31 // pred_check_branch
          %1143 = sbr.rel (%p1141) target = $region64
        $region63: #{rnn_one_layer_forward.2} parent=31 // pred_region
          %1144 = dma.done [#allocation11], 32
        $region64: #{rnn_one_layer_forward.2} parent=31 // pred_fallthru
          _
      $region32: #{rnn_one_layer_forward.2} parent=5 // pred_fallthru
        _
      %p1145 = scmp.le.s32.totalorder 2, %s19
      // Predicated region
      $region65: #{rnn_one_layer_forward.2} parent=5 // pred_check
        %p1146 = pneg %p1145
      $region66: #{rnn_one_layer_forward.2} parent=5 // pred_check_branch
        %1148 = sbr.rel (%p1146) target = $region68
      $region67: #{rnn_one_layer_forward.2} parent=5 // pred_region
        %s1149 = ssub.s32 %s19, 2
        // Predicated region
        $region69: #{rnn_one_layer_forward.2} parent=67 // pred_check
          %p1150 = pneg %p116
        $region70: #{rnn_one_layer_forward.2} parent=67 // pred_check_branch
          %1152 = sbr.rel (%p1150) target = $region72
        $region71: #{rnn_one_layer_forward.2} parent=67 // pred_region
          %s1153 = sand.u32 %s101, 1
          %s1154 = scalar_lea.sflag [#allocation5], %s1153
          %s1155 = sand.u32 %s101, 1
          %s1156 = smul.addr %s1155, 16
          %s1157 = scalar_lea.vmem [#allocation9], %s1156
          %1158 = dma.done %s1154, 256
        $region72: #{rnn_one_layer_forward.2} parent=67 // pred_fallthru
          _
      $region68: #{rnn_one_layer_forward.2} parent=5 // pred_fallthru
        _
    $region6: #{rnn_one_layer_forward.2} parent=1 // loop_footer
      %s23 = sadd.s32 1, %s19
    $region7: #{rnn_one_layer_forward.2} parent=1 // loop_footer_branch
      %18 = sbr.rel target = $region3
    $region8: #{rnn_one_layer_forward.2} parent=1 // loop_exit
      _
    %1159 = vsyncpa [#allocation4], 1
    %s1160 = scalar_lea.sflag [#allocation4], 1
    %1161 = vsyncpa %s1160, 1
    %1162 = vsyncpa [#allocation7], 1
    %1163 = vsyncpa [#allocation5], 1
    %s1164 = scalar_lea.sflag [#allocation5], 1
    %1165 = vsyncpa %s1164, 1
    %1166 = vsyncpa [#allocation11], 1

</llo_original>
